<compile_context>
chip_gen: v5e
topology: v5e:2x2
jax: 0.10.0
libtpu: 0.0.40
codegen_flags: <defaults>
</compile_context>

<pallas_src>
import functools

import jax
import jax.numpy as jnp
from jax.experimental import pallas as pl
from jax.experimental.pallas import tpu as pltpu


def channel_softmax_kernel(sa_ref, ra_ref, w1_ref, w2_ref,
                           out_sa_ref, out_ra_ref, *, inv_hw, c):
    """One batch tile.

    sa_ref / ra_ref / out_*_ref : (bb, C, HW) feature-map tiles in VMEM
                                  (HW = full h*w, no padding)
    w1_ref : (2C, 2H) block-diagonal [[w_sa1, 0], [0, w_ra1]]
    w2_ref : (2H, 2C) block-diagonal [[w_sa2, 0], [0, w_ra2]]
    inv_hw : 1 / (h*w)

    Every stage is strictly per-batch-row, so a partial (out-of-bounds) last
    block is safe: garbage rows produce garbage rows whose writeback is
    discarded by Pallas, and never touch valid rows.
    """
    f32 = jnp.float32

    # ---- Stage 1: global average pool straight from the refs (do NOT keep
    # the full feature maps live across the FC/softmax). -----------------------
    gap_sa = jnp.sum(sa_ref[...].astype(f32), axis=-1) * inv_hw   # (bb, C)
    gap_ra = jnp.sum(ra_ref[...].astype(f32), axis=-1) * inv_hw   # (bb, C)
    gap = jnp.concatenate([gap_sa, gap_ra], axis=-1)              # (bb, 2C)

    # ---- Stage 2: both FC branches fused into one matmul pair via the
    # block-diagonal weights (off-diagonal zeros keep the branches separate). --
    h = jnp.maximum(
        jnp.dot(gap, w1_ref[...], preferred_element_type=f32), 0.0)   # (bb, 2H)
    y = jnp.dot(h, w2_ref[...], preferred_element_type=f32)           # (bb, 2C)
    sa_y = y[:, :c]
    ra_y = y[:, c:]

    # ---- Stage 3: 2-way softmax over the {sa, ra} pair == sigmoid of the
    # logit difference (single exp + exact reciprocal; numerically safe:
    # exp overflow -> inf -> weight 0, never NaN). ------------------------------
    sa_w = pl.reciprocal(1.0 + jnp.exp(ra_y - sa_y))              # (bb, C)
    ra_w = 1.0 - sa_w

    # ---- Stage 4: re-read the feature maps only now for the broadcast
    # multiply, done natively in the I/O dtype (bf16-native on v6e/v7x). -------
    sa_w = sa_w[:, :, None].astype(out_sa_ref.dtype)              # (bb, C, 1)
    ra_w = ra_w[:, :, None].astype(out_ra_ref.dtype)
    out_sa_ref[...] = (sa_ref[...] * sa_w).astype(out_sa_ref.dtype)
    out_ra_ref[...] = (ra_ref[...] * ra_w).astype(out_ra_ref.dtype)


# 8 live block buffers (2 inputs + 2 outputs, double-buffered) must fit this.
_VMEM_BLOCK_BUDGET = 16 * 1024 * 1024
# Scoped-VMEM limit handed to Mosaic: fits v7x's 64 MiB physical VMEM with
# headroom, and raises v5e's 16 MiB default so large tiles still compile.
_VMEM_LIMIT_BYTES = 32 * 1024 * 1024


def _pick_batch_block(b, c, hw, itemsize):
    """Largest batch tile whose 8 double-buffered feature blocks fit the VMEM
    budget, capped at ceil(b/2) so the parallel grid has >= 2 steps (v7x has
    two TensorCores, each with its own HBM path)."""
    per_batch_row = 8 * c * hw * itemsize
    bb = max(1, _VMEM_BLOCK_BUDGET // per_batch_row)
    if b >= 2:
        bb = min(bb, pl.cdiv(b, 2))
    return int(min(bb, b))


@functools.partial(jax.jit, static_argnames=("batch_block",))
def channel_softmax(sa, ra, w_sa1, w_sa2, w_ra1, w_ra2, batch_block=None):
    """sa, ra: (b, c, h, w) NCHW.  Weights already transposed so that
    x @ w == PyTorch x @ W.T:  w_*1: (c, hid), w_*2: (hid, c)."""
    b, c, h, w = sa.shape
    assert ra.shape == sa.shape
    hid = w_sa1.shape[1]
    hw = h * w

    # Lane axis = full h*w (no padding, no cropping): block trailing dims equal
    # the full array dims, so the (8,128) divisibility rule does not apply.
    sa_f = sa.reshape(b, c, hw)
    ra_f = ra.reshape(b, c, hw)

    # Block-diagonal fused weights for the single matmul pair in the kernel
    # (constant-folded / fused under jit).
    w1 = jnp.zeros((2 * c, 2 * hid), jnp.float32)
    w1 = w1.at[:c, :hid].set(w_sa1.astype(jnp.float32))
    w1 = w1.at[c:, hid:].set(w_ra1.astype(jnp.float32))
    w2 = jnp.zeros((2 * hid, 2 * c), jnp.float32)
    w2 = w2.at[:hid, :c].set(w_sa2.astype(jnp.float32))
    w2 = w2.at[hid:, c:].set(w_ra2.astype(jnp.float32))

    if batch_block is None:
        bb = _pick_batch_block(b, c, hw, sa.dtype.itemsize)
    else:
        bb = max(1, min(int(batch_block), b))
    grid = (pl.cdiv(b, bb),)   # partial last block is safe (per-row kernel)

    feat_spec = pl.BlockSpec((bb, c, hw), lambda i: (i, 0, 0))
    w1_spec = pl.BlockSpec((2 * c, 2 * hid), lambda i: (0, 0))
    w2_spec = pl.BlockSpec((2 * hid, 2 * c), lambda i: (0, 0))

    kernel = functools.partial(channel_softmax_kernel, inv_hw=1.0 / hw, c=c)

    out_sa, out_ra = pl.pallas_call(
        kernel,
        out_shape=(
            jax.ShapeDtypeStruct((b, c, hw), sa.dtype),
            jax.ShapeDtypeStruct((b, c, hw), ra.dtype),
        ),
        grid_spec=pltpu.PrefetchScalarGridSpec(
            num_scalar_prefetch=0,
            grid=grid,
            in_specs=[feat_spec, feat_spec, w1_spec, w2_spec],
            out_specs=(feat_spec, feat_spec),
        ),
        compiler_params=pltpu.CompilerParams(
            dimension_semantics=("parallel",),       # megacore-shards batch
            vmem_limit_bytes=_VMEM_LIMIT_BYTES),
    )(sa_f, ra_f, w1, w2)

    return out_sa.reshape(b, c, h, w), out_ra.reshape(b, c, h, w)


def _reference(sa, ra, w_sa1, w_sa2, w_ra1, w_ra2):
    gap_sa = sa.mean(axis=(2, 3))
    gap_ra = ra.mean(axis=(2, 3))
    sa_y = jnp.maximum(gap_sa @ w_sa1, 0.0) @ w_sa2
    ra_y = jnp.maximum(gap_ra @ w_ra1, 0.0) @ w_ra2
    y = jax.nn.softmax(jnp.stack([sa_y, ra_y], axis=0), axis=0)
    return sa * y[0][:, :, None, None], ra * y[1][:, :, None, None]


if __name__ == "__main__":
    key = jax.random.PRNGKey(0)
    k_sa, k_ra, k1, k2, k3, k4 = jax.random.split(key, 6)

    # c is fixed at 64 by the module's Linear(64, 8); small batch/spatial demo.
    b, c, h, w = 8, 64, 16, 16
    sa = jax.random.normal(k_sa, (b, c, h, w), dtype=jnp.float32)
    ra = jax.random.normal(k_ra, (b, c, h, w), dtype=jnp.float32)

    # Deterministic kaiming-normal (fan_in, relu) init, stored transposed so
    # that x @ w matches PyTorch's x @ W.T.
    std1 = (2.0 / 64.0) ** 0.5  # Linear(64 -> 8), fan_in = 64
    std2 = (2.0 / 8.0) ** 0.5   # Linear(8 -> 64), fan_in = 8
    w_sa1 = jax.random.normal(k1, (64, 8), dtype=jnp.float32) * std1
    w_sa2 = jax.random.normal(k2, (8, 64), dtype=jnp.float32) * std2
    w_ra1 = jax.random.normal(k3, (64, 8), dtype=jnp.float32) * std1
    w_ra2 = jax.random.normal(k4, (8, 64), dtype=jnp.float32) * std2

    # Auto tile: budget gives bb=32, the >=2-grid-step cap gives bb=4 ->
    # grid=(2,), so the demo exercises the double-buffered pipeline and the
    # v7x two-TensorCore sharding path.
    out_sa, out_ra = channel_softmax(sa, ra, w_sa1, w_sa2, w_ra1, w_ra2)
    jax.block_until_ready((out_sa, out_ra))

    ref_sa, ref_ra = _reference(sa, ra, w_sa1, w_sa2, w_ra1, w_ra2)
    assert jnp.allclose(out_sa, ref_sa, atol=1e-5, rtol=1e-5)
    assert jnp.allclose(out_ra, ref_ra, atol=1e-5, rtol=1e-5)

    print("KERNEL_OK")
</pallas_src>

<mosaic_0001>
module attributes {stable_mosaic.version = 11 : i64} {
  func.func @channel_softmax_kernel(%arg0: i32, %arg1: memref<4x64x256xf32, #tpu.memory_space<vmem>>, %arg2: memref<4x64x256xf32, #tpu.memory_space<vmem>>, %arg3: memref<128x16xf32, #tpu.memory_space<vmem>>, %arg4: memref<16x128xf32, #tpu.memory_space<vmem>>, %arg5: memref<4x64x256xf32, #tpu.memory_space<vmem>>, %arg6: memref<4x64x256xf32, #tpu.memory_space<vmem>>) attributes {dimension_semantics = [#tpu.dimension_semantics<parallel>], iteration_bounds = array<i64: 2>, scalar_prefetch = 0 : i64, scratch_operands = 0 : i64, tpu.core_type = #tpu.core_type<tc>, window_params = [{transform_indices = @transform_0, window_bounds = array<i64: 4, 64, 256>}, {transform_indices = @transform_1, window_bounds = array<i64: 4, 64, 256>}, {pipeline_mode = #tpu.pipeline_mode<synchronous>, transform_indices = @transform_2, window_bounds = array<i64: 128, 16>}, {pipeline_mode = #tpu.pipeline_mode<synchronous>, transform_indices = @transform_3, window_bounds = array<i64: 16, 128>}, {transform_indices = @transform_4, window_bounds = array<i64: 4, 64, 256>}, {transform_indices = @transform_5, window_bounds = array<i64: 4, 64, 256>}]} {
    %c0 = arith.constant 0 : index
    %c0_0 = arith.constant 0 : index
    %c0_1 = arith.constant 0 : index
    %0 = vector.load %arg1[%c0, %c0_0, %c0_1] : memref<4x64x256xf32, #tpu.memory_space<vmem>>, vector<4x64x256xf32>
    %cst = arith.constant dense<0.000000e+00> : vector<4x64xf32>
    %1 = vector.multi_reduction <add>, %0, %cst [2] : vector<4x64x256xf32> to vector<4x64xf32>
    %cst_2 = arith.constant 3.906250e-03 : f32
    %2 = vector.broadcast %cst_2 : f32 to vector<4x64xf32>
    %3 = arith.mulf %1, %2 : vector<4x64xf32>
    %c0_3 = arith.constant 0 : index
    %c0_4 = arith.constant 0 : index
    %c0_5 = arith.constant 0 : index
    %4 = vector.load %arg2[%c0_3, %c0_4, %c0_5] : memref<4x64x256xf32, #tpu.memory_space<vmem>>, vector<4x64x256xf32>
    %cst_6 = arith.constant dense<0.000000e+00> : vector<4x64xf32>
    %5 = vector.multi_reduction <add>, %4, %cst_6 [2] : vector<4x64x256xf32> to vector<4x64xf32>
    %cst_7 = arith.constant 3.906250e-03 : f32
    %6 = vector.broadcast %cst_7 : f32 to vector<4x64xf32>
    %7 = arith.mulf %5, %6 : vector<4x64xf32>
    %8 = tpu.concatenate %3, %7 in 1 : vector<4x64xf32>, vector<4x64xf32> -> vector<4x128xf32>
    %c0_8 = arith.constant 0 : index
    %c0_9 = arith.constant 0 : index
    %9 = vector.load %arg3[%c0_8, %c0_9] : memref<128x16xf32, #tpu.memory_space<vmem>>, vector<128x16xf32>
    %cst_10 = arith.constant dense<0.000000e+00> : vector<4x16xf32>
    %10 = tpu.matmul %8, %9, %cst_10 {dimension_numbers = #tpu.dot_dimension_numbers<[1], [0], [0], [1], [0, 0, 1, 1], [], []>} : vector<4x128xf32>, vector<128x16xf32>, vector<4x16xf32> -> vector<4x16xf32>
    %cst_11 = arith.constant 0.000000e+00 : f32
    %11 = vector.broadcast %cst_11 : f32 to vector<4x16xf32>
    %12 = arith.maximumf %10, %11 : vector<4x16xf32>
    %c0_12 = arith.constant 0 : index
    %c0_13 = arith.constant 0 : index
    %13 = vector.load %arg4[%c0_12, %c0_13] : memref<16x128xf32, #tpu.memory_space<vmem>>, vector<16x128xf32>
    %cst_14 = arith.constant dense<0.000000e+00> : vector<4x128xf32>
    %14 = tpu.matmul %12, %13, %cst_14 {dimension_numbers = #tpu.dot_dimension_numbers<[1], [0], [0], [1], [0, 0, 1, 1], [], []>} : vector<4x16xf32>, vector<16x128xf32>, vector<4x128xf32> -> vector<4x128xf32>
    %15 = vector.extract_strided_slice %14 {offsets = [0, 0], sizes = [4, 64], strides = [1, 1]} : vector<4x128xf32> to vector<4x64xf32>
    %16 = vector.extract_strided_slice %14 {offsets = [0, 64], sizes = [4, 64], strides = [1, 1]} : vector<4x128xf32> to vector<4x64xf32>
    %17 = arith.subf %16, %15 : vector<4x64xf32>
    %18 = math.exp %17 : vector<4x64xf32>
    %cst_15 = arith.constant 1.000000e+00 : f32
    %19 = vector.broadcast %cst_15 : f32 to vector<4x64xf32>
    %20 = arith.addf %19, %18 : vector<4x64xf32>
    %21 = tpu.reciprocal %20 : vector<4x64xf32> -> vector<4x64xf32>
    %cst_16 = arith.constant 1.000000e+00 : f32
    %22 = vector.broadcast %cst_16 : f32 to vector<4x64xf32>
    %23 = arith.subf %22, %21 : vector<4x64xf32>
    %24 = vector.shape_cast %21 : vector<4x64xf32> to vector<4x64x1xf32>
    %25 = vector.shape_cast %23 : vector<4x64xf32> to vector<4x64x1xf32>
    %c0_17 = arith.constant 0 : index
    %c0_18 = arith.constant 0 : index
    %c0_19 = arith.constant 0 : index
    %26 = vector.load %arg1[%c0_17, %c0_18, %c0_19] : memref<4x64x256xf32, #tpu.memory_space<vmem>>, vector<4x64x256xf32>
    %27 = vector.broadcast %24 : vector<4x64x1xf32> to vector<4x64x256xf32>
    %28 = arith.mulf %26, %27 : vector<4x64x256xf32>
    %c0_20 = arith.constant 0 : index
    %c0_21 = arith.constant 0 : index
    %c0_22 = arith.constant 0 : index
    %29 = vector.load %arg5[%c0_20, %c0_21, %c0_22] : memref<4x64x256xf32, #tpu.memory_space<vmem>>, vector<4x64x256xf32>
    tpu.vector_store %arg5[%c0_20, %c0_21, %c0_22], %28 {strides = array<i32>} : memref<4x64x256xf32, #tpu.memory_space<vmem>>, vector<4x64x256xf32>,
    %c0_23 = arith.constant 0 : index
    %c0_24 = arith.constant 0 : index
    %c0_25 = arith.constant 0 : index
    %30 = vector.load %arg2[%c0_23, %c0_24, %c0_25] : memref<4x64x256xf32, #tpu.memory_space<vmem>>, vector<4x64x256xf32>
    %31 = vector.broadcast %25 : vector<4x64x1xf32> to vector<4x64x256xf32>
    %32 = arith.mulf %30, %31 : vector<4x64x256xf32>
    %c0_26 = arith.constant 0 : index
    %c0_27 = arith.constant 0 : index
    %c0_28 = arith.constant 0 : index
    %33 = vector.load %arg6[%c0_26, %c0_27, %c0_28] : memref<4x64x256xf32, #tpu.memory_space<vmem>>, vector<4x64x256xf32>
    tpu.vector_store %arg6[%c0_26, %c0_27, %c0_28], %32 {strides = array<i32>} : memref<4x64x256xf32, #tpu.memory_space<vmem>>, vector<4x64x256xf32>,
    return
  }
  func.func @transform_0(%arg0: i32) -> (i32, i32, i32) {
    %c0_i32 = arith.constant 0 : i32
    %c0_i32_0 = arith.constant 0 : i32
    %c0_i32_1 = arith.constant 0 : i32
    return %arg0, %c0_i32, %c0_i32_0 : i32, i32, i32
  }
  func.func @transform_1(%arg0: i32) -> (i32, i32, i32) {
    %c0_i32 = arith.constant 0 : i32
    %c0_i32_0 = arith.constant 0 : i32
    %c0_i32_1 = arith.constant 0 : i32
    return %arg0, %c0_i32, %c0_i32_0 : i32, i32, i32
  }
  func.func @transform_2(%arg0: i32) -> (i32, i32) {
    %c0_i32 = arith.constant 0 : i32
    %c0_i32_0 = arith.constant 0 : i32
    %c0_i32_1 = arith.constant 0 : i32
    return %c0_i32, %c0_i32_0 : i32, i32
  }
  func.func @transform_3(%arg0: i32) -> (i32, i32) {
    %c0_i32 = arith.constant 0 : i32
    %c0_i32_0 = arith.constant 0 : i32
    %c0_i32_1 = arith.constant 0 : i32
    return %c0_i32, %c0_i32_0 : i32, i32
  }
  func.func @transform_4(%arg0: i32) -> (i32, i32, i32) {
    %c0_i32 = arith.constant 0 : i32
    %c0_i32_0 = arith.constant 0 : i32
    %c0_i32_1 = arith.constant 0 : i32
    return %arg0, %c0_i32, %c0_i32_0 : i32, i32, i32
  }
  func.func @transform_5(%arg0: i32) -> (i32, i32, i32) {
    %c0_i32 = arith.constant 0 : i32
    %c0_i32_0 = arith.constant 0 : i32
    %c0_i32_1 = arith.constant 0 : i32
    return %arg0, %c0_i32, %c0_i32_0 : i32, i32, i32
  }
}

</mosaic_0001>

<llo_original>
// kernel: channel_softmax.1
$region0: #{channel_softmax.1}
  #allocation0 [shape = 'u32[]', space=smem, size = 0x4, offset = 0x4, fixed_abs, tag = 'smem constant byte address 0x4 - core index']
  #allocation1 [shape = 'u32[72,128]{1,0:T(1,128)}', space=vmem, size = 0x9000, scoped, tag = 'internal scratch']
  %s0 = inlined_call_operand.vmem [shape: f32[8,64,256], index: 0, kind: input, shape index: {}]
  %s1 = inlined_call_operand.vmem [shape: f32[8,64,256], index: 1, kind: input, shape index: {}]
  %s2 = inlined_call_operand.vmem [shape: f32[128,16], index: 2, kind: input, shape index: {}]
  %s3 = inlined_call_operand.vmem [shape: f32[16,128], index: 3, kind: input, shape index: {}]
  %s4 = inlined_call_operand.vmem [shape: f32[8,64,256], index: 4, kind: output, shape index: {0}]
  %s5 = inlined_call_operand.vmem [shape: f32[8,64,256], index: 5, kind: output, shape index: {1}]
  %6 = xla_tuple %s4, %s5
  %s7 = sld [smem:[#allocation0]]
  $region57: #{channel_softmax.1} parent=0
    _
  %s9 = ssub.s32 1, %s7
  %s10 = scalar_select 0, %s9, %s7
  loop: start=0, step=1, limit=4
  $region2: #{channel_softmax.1} parent=0 // loop_pre_header
    _
  $region3: #{channel_softmax.1} parent=0 // loop_header
    %s12 = sphi 0, %s16
    %p13 = scmp.ge.s32.totalorder %s12, 4
    %s22 = sphi 0, %s24
    %s25 = sphi 0, %s22
    %s26 = sphi 0, %s25
    %s42 = sphi 0, %s26
    %s48 = sphi 0, %s50
    %s51 = sphi 0, %s48
    %s52 = sphi 0, %s51
    %s68 = sphi 0, %s52
    %s72 = sphi 0, %s72
    %s74 = sphi 0, %s72
    %s75 = sphi 0, %s74
    %s89 = sphi 0, %s75
    %s93 = sphi 0, %s93
    %s95 = sphi 0, %s93
    %s96 = sphi 0, %s95
    %s110 = sphi 0, %s96
    %s116 = sphi 0, %s118
    %s119 = sphi 0, %s116
    %s120 = sphi 0, %s119
    %s136 = sphi 0, %s120
    %s142 = sphi 0, %s144
    %s145 = sphi 0, %s142
    %s146 = sphi 0, %s145
    %s162 = sphi 0, %s146
  $region4: #{channel_softmax.1} parent=0 // loop_header_branch
    %15 = sbr.rel (%p13) target = $region8
  $region5: #{channel_softmax.1} parent=0 // loop_body
    %s17 = ssub.s32 %s12, 1
    %s18 = ssub.s32 %s12, 2
    %s19 = sadd.s32 %s12, 1
    %s20 = ssub.s32 %s12, %s19
    %p21 = scmp.eq.s32.totalorder %s20, 0
    %s23 = sadd.s32 %s22, 1
    %s24 = scalar_select %p21, %s22, %s23
    %p27 = pneg %p21
    %p28 = scmp.eq.s32.totalorder %s12, 1
    %p29 = por %p27, %p28
    %p30 = scmp.ne.s32.totalorder %s22, %s25
    %p31 = scmp.eq.s32.totalorder %s12, 0
    %p32 = por %p30, %p31
    %p33 = scmp.ne.s32.totalorder %s22, %s25
    %p34 = scmp.eq.s32.totalorder %s17, 1
    %p35 = por %p33, %p34
    %p36 = scmp.ne.s32.totalorder %s25, %s26
    %p37 = scmp.eq.s32.totalorder %s17, 0
    %p38 = por %p36, %p37
    %p39 = scmp.ne.s32.totalorder %s25, %s26
    %p40 = scmp.eq.s32.totalorder %s18, 1
    %p41 = por %p39, %p40
    %p43 = scmp.ne.s32.totalorder %s26, %s42
    %p44 = scmp.eq.s32.totalorder %s18, 0
    %p45 = por %p43, %p44
    %s46 = ssub.s32 %s12, %s19
    %p47 = scmp.eq.s32.totalorder %s46, 0
    %s49 = sadd.s32 %s48, 1
    %s50 = scalar_select %p47, %s48, %s49
    %p53 = pneg %p47
    %p54 = scmp.eq.s32.totalorder %s12, 1
    %p55 = por %p53, %p54
    %p56 = scmp.ne.s32.totalorder %s48, %s51
    %p57 = scmp.eq.s32.totalorder %s12, 0
    %p58 = por %p56, %p57
    %p59 = scmp.ne.s32.totalorder %s48, %s51
    %p60 = scmp.eq.s32.totalorder %s17, 1
    %p61 = por %p59, %p60
    %p62 = scmp.ne.s32.totalorder %s51, %s52
    %p63 = scmp.eq.s32.totalorder %s17, 0
    %p64 = por %p62, %p63
    %p65 = scmp.ne.s32.totalorder %s51, %s52
    %p66 = scmp.eq.s32.totalorder %s18, 1
    %p67 = por %p65, %p66
    %p69 = scmp.ne.s32.totalorder %s52, %s68
    %p70 = scmp.eq.s32.totalorder %s18, 0
    %p71 = por %p69, %p70
    %s73 = sadd.s32 %s72, 1
    %p76 = scmp.eq.s32.totalorder %s12, 1
    %p77 = scmp.ne.s32.totalorder %s72, %s74
    %p78 = scmp.eq.s32.totalorder %s12, 0
    %p79 = por %p77, %p78
    %p80 = scmp.ne.s32.totalorder %s72, %s74
    %p81 = scmp.eq.s32.totalorder %s17, 1
    %p82 = por %p80, %p81
    %p83 = scmp.ne.s32.totalorder %s74, %s75
    %p84 = scmp.eq.s32.totalorder %s17, 0
    %p85 = por %p83, %p84
    %p86 = scmp.ne.s32.totalorder %s74, %s75
    %p87 = scmp.eq.s32.totalorder %s18, 1
    %p88 = por %p86, %p87
    %p90 = scmp.ne.s32.totalorder %s75, %s89
    %p91 = scmp.eq.s32.totalorder %s18, 0
    %p92 = por %p90, %p91
    %s94 = sadd.s32 %s93, 1
    %p97 = scmp.eq.s32.totalorder %s12, 1
    %p98 = scmp.ne.s32.totalorder %s93, %s95
    %p99 = scmp.eq.s32.totalorder %s12, 0
    %p100 = por %p98, %p99
    %p101 = scmp.ne.s32.totalorder %s93, %s95
    %p102 = scmp.eq.s32.totalorder %s17, 1
    %p103 = por %p101, %p102
    %p104 = scmp.ne.s32.totalorder %s95, %s96
    %p105 = scmp.eq.s32.totalorder %s17, 0
    %p106 = por %p104, %p105
    %p107 = scmp.ne.s32.totalorder %s95, %s96
    %p108 = scmp.eq.s32.totalorder %s18, 1
    %p109 = por %p107, %p108
    %p111 = scmp.ne.s32.totalorder %s96, %s110
    %p112 = scmp.eq.s32.totalorder %s18, 0
    %p113 = por %p111, %p112
    %s114 = ssub.s32 %s12, %s19
    %p115 = scmp.eq.s32.totalorder %s114, 0
    %s117 = sadd.s32 %s116, 1
    %s118 = scalar_select %p115, %s116, %s117
    %p121 = pneg %p115
    %p122 = scmp.eq.s32.totalorder %s12, 1
    %p123 = por %p121, %p122
    %p124 = scmp.ne.s32.totalorder %s116, %s119
    %p125 = scmp.eq.s32.totalorder %s12, 0
    %p126 = por %p124, %p125
    %p127 = scmp.ne.s32.totalorder %s116, %s119
    %p128 = scmp.eq.s32.totalorder %s17, 1
    %p129 = por %p127, %p128
    %p130 = scmp.ne.s32.totalorder %s119, %s120
    %p131 = scmp.eq.s32.totalorder %s17, 0
    %p132 = por %p130, %p131
    %p133 = scmp.ne.s32.totalorder %s119, %s120
    %p134 = scmp.eq.s32.totalorder %s18, 1
    %p135 = por %p133, %p134
    %p137 = scmp.ne.s32.totalorder %s120, %s136
    %p138 = scmp.eq.s32.totalorder %s18, 0
    %p139 = por %p137, %p138
    %s140 = ssub.s32 %s12, %s19
    %p141 = scmp.eq.s32.totalorder %s140, 0
    %s143 = sadd.s32 %s142, 1
    %s144 = scalar_select %p141, %s142, %s143
    %p147 = pneg %p141
    %p148 = scmp.eq.s32.totalorder %s12, 1
    %p149 = por %p147, %p148
    %p150 = scmp.ne.s32.totalorder %s142, %s145
    %p151 = scmp.eq.s32.totalorder %s12, 0
    %p152 = por %p150, %p151
    %p153 = scmp.ne.s32.totalorder %s142, %s145
    %p154 = scmp.eq.s32.totalorder %s17, 1
    %p155 = por %p153, %p154
    %p156 = scmp.ne.s32.totalorder %s145, %s146
    %p157 = scmp.eq.s32.totalorder %s17, 0
    %p158 = por %p156, %p157
    %p159 = scmp.ne.s32.totalorder %s145, %s146
    %p160 = scmp.eq.s32.totalorder %s18, 1
    %p161 = por %p159, %p160
    %p163 = scmp.ne.s32.totalorder %s146, %s162
    %p164 = scmp.eq.s32.totalorder %s18, 0
    %p165 = por %p163, %p164
    %p166 = scmp.le.s32.totalorder 1, %s12
    %p167 = scmp.lt.s32.totalorder %s12, 3
    %p168 = pnand %p166, %p167
    %p169 = pneg %p168
    // Predicated region
    $region9: #{channel_softmax.1} parent=5 // pred_check
      _
    $region10: #{channel_softmax.1} parent=5 // pred_check_branch
      %171 = sbr.rel (%p168) target = $region12
    $region11: #{channel_softmax.1} parent=5 // pred_region
      %s172 = ssub.s32 %s12, 1
      // Predicated region
      $region13: #{channel_softmax.1} parent=11 // pred_check
        %p173 = pneg %p85
      $region14: #{channel_softmax.1} parent=11 // pred_check_branch
        %175 = sbr.rel (%p173) target = $region16
      $region15: #{channel_softmax.1} parent=11 // pred_region
        _
      $region16: #{channel_softmax.1} parent=11 // pred_fallthru
        _
      // Predicated region
      $region17: #{channel_softmax.1} parent=11 // pred_check
        %p176 = pneg %p106
      $region18: #{channel_softmax.1} parent=11 // pred_check_branch
        %178 = sbr.rel (%p176) target = $region20
      $region19: #{channel_softmax.1} parent=11 // pred_region
        _
      $region20: #{channel_softmax.1} parent=11 // pred_fallthru
        _
    $region12: #{channel_softmax.1} parent=5 // pred_fallthru
      _
    %p179 = scmp.lt.s32.totalorder %s12, 2
    // Predicated region
    $region21: #{channel_softmax.1} parent=5 // pred_check
      %p180 = pneg %p179
    $region22: #{channel_softmax.1} parent=5 // pred_check_branch
      %182 = sbr.rel (%p180) target = $region24
    $region23: #{channel_softmax.1} parent=5 // pred_region
      // Predicated region
      $region25: #{channel_softmax.1} parent=23 // pred_check
        %p183 = pneg %p32
      $region26: #{channel_softmax.1} parent=23 // pred_check_branch
        %185 = sbr.rel (%p183) target = $region28
      $region27: #{channel_softmax.1} parent=23 // pred_region
        %s186 = smul.u32 4, %s12
        %p187 = scmp.lt.s32.totalorder %s186, 7
        %s188 = scalar_select %p187, %s186, 7
        %s189 = smul.addr %s188, 16
        %s190 = smul.addr %s189, 8
        %s191 = scalar_lea.vmem %s0, %s190
        %s192 = smul.u32 4, %s12
      $region28: #{channel_softmax.1} parent=23 // pred_fallthru
        _
      // Predicated region
      $region29: #{channel_softmax.1} parent=23 // pred_check
        %p193 = pneg %p58
      $region30: #{channel_softmax.1} parent=23 // pred_check_branch
        %195 = sbr.rel (%p193) target = $region32
      $region31: #{channel_softmax.1} parent=23 // pred_region
        %s196 = smul.u32 4, %s12
        %p197 = scmp.lt.s32.totalorder %s196, 7
        %s198 = scalar_select %p197, %s196, 7
        %s199 = smul.addr %s198, 16
        %s200 = smul.addr %s199, 8
        %s201 = scalar_lea.vmem %s1, %s200
        %s202 = smul.u32 4, %s12
      $region32: #{channel_softmax.1} parent=23 // pred_fallthru
        _
    $region24: #{channel_softmax.1} parent=5 // pred_fallthru
      _
    %p203 = scmp.le.s32.totalorder 1, %s12
    %p204 = scmp.lt.s32.totalorder %s12, 3
    %p205 = pnand %p203, %p204
    %p206 = pneg %p205
    // Predicated region
    $region33: #{channel_softmax.1} parent=5 // pred_check
      _
    $region34: #{channel_softmax.1} parent=5 // pred_check_branch
      %208 = sbr.rel (%p205) target = $region36
    $region35: #{channel_softmax.1} parent=5 // pred_region
      %s209 = ssub.s32 %s12, 1
      %s210 = smul.u32 4, %s17
      %p211 = scmp.lt.s32.totalorder %s210, 7
      %s212 = scalar_select %p211, %s210, 7
      %s213 = smul.addr %s212, 16
      %s214 = smul.addr %s213, 8
      %s215 = scalar_lea.vmem %s0, %s214
      %p216 = pneg %p38
      %p217 = pneg %p35
      %s218 = smul.u32 4, %s17
      %p219 = scmp.lt.s32.totalorder %s218, 7
      %s220 = scalar_select %p219, %s218, 7
      %s221 = smul.addr %s220, 16
      %s222 = smul.addr %s221, 8
      %s223 = scalar_lea.vmem %s1, %s222
      %p224 = pneg %p64
      %p225 = pneg %p61
      %p226 = pneg %p85
      %p227 = pneg %p82
      %p228 = pneg %p106
      %p229 = pneg %p103
      %p230 = pneg %p132
      %p231 = pneg %p129
      %s232 = smul.u32 4, %s17
      %p233 = scmp.lt.s32.totalorder %s232, 7
      %s234 = scalar_select %p233, %s232, 7
      %s235 = smul.addr %s234, 16
      %s236 = smul.addr %s235, 8
      %s237 = scalar_lea.vmem %s4, %s236
      %p238 = pneg %p158
      %p239 = pneg %p155
      %s240 = smul.u32 4, %s17
      %p241 = scmp.lt.s32.totalorder %s240, 7
      %s242 = scalar_select %p241, %s240, 7
      %s243 = smul.addr %s242, 16
      %s244 = smul.addr %s243, 8
      %s245 = scalar_lea.vmem %s5, %s244
      %s246 = smul.u32 4, %s17
      %p247 = scmp.lt.s32.totalorder %s246, 7
      %s248 = scalar_select %p247, %s246, 7
      %s249 = smul.addr %s248, 16
      %s250 = smul.addr %s249, 8
      %s251 = scalar_lea.vmem %s0, %s250
      %s252 = smul.u32 4, %s17
      %s253 = smul.u32 4, %s17
      %p254 = scmp.lt.s32.totalorder %s253, 7
      %s255 = scalar_select %p254, %s253, 7
      %s256 = smul.addr %s255, 16
      %s257 = smul.addr %s256, 8
      %s258 = scalar_lea.vmem %s1, %s257
      %s259 = smul.u32 4, %s17
      %s260 = smul.u32 4, %s17
      %p261 = scmp.lt.s32.totalorder %s260, 7
      %s262 = scalar_select %p261, %s260, 7
      %s263 = smul.addr %s262, 16
      %s264 = smul.addr %s263, 8
      %s265 = scalar_lea.vmem %s4, %s264
      %s266 = smul.u32 4, %s17
      %s267 = smul.u32 4, %s17
      %p268 = scmp.lt.s32.totalorder %s267, 7
      %s269 = scalar_select %p268, %s267, 7
      %s270 = smul.addr %s269, 16
      %s271 = smul.addr %s270, 8
      %s272 = scalar_lea.vmem %s5, %s271
      %s273 = smul.u32 4, %s17
      %v274 = vld [vmem:[%s251] sm:$0xff]
      %v275 = vld [vmem:[%s251 + $0x8] sm:$0xff]
      %v276 = vld [vmem:[%s251 + $0x10] sm:$0xff]
      %v277 = vld [vmem:[%s251 + $0x18] sm:$0xff]
      %v278 = vld [vmem:[%s251 + $0x20] sm:$0xff]
      %v279 = vld [vmem:[%s251 + $0x28] sm:$0xff]
      %v280 = vld [vmem:[%s251 + $0x30] sm:$0xff]
      %v281 = vld [vmem:[%s251 + $0x38] sm:$0xff]
      %v282 = vld [vmem:[%s251 + $0x40] sm:$0xff]
      %v283 = vld [vmem:[%s251 + $0x48] sm:$0xff]
      %v284 = vld [vmem:[%s251 + $0x50] sm:$0xff]
      %v285 = vld [vmem:[%s251 + $0x58] sm:$0xff]
      %v286 = vld [vmem:[%s251 + $0x60] sm:$0xff]
      %v287 = vld [vmem:[%s251 + $0x68] sm:$0xff]
      %v288 = vld [vmem:[%s251 + $0x70] sm:$0xff]
      %v289 = vld [vmem:[%s251 + $0x78] sm:$0xff]
      %v290 = vld [vmem:[%s251 + $0x80] sm:$0xff]
      %v291 = vld [vmem:[%s251 + $0x88] sm:$0xff]
      %v292 = vld [vmem:[%s251 + $0x90] sm:$0xff]
      %v293 = vld [vmem:[%s251 + $0x98] sm:$0xff]
      %v294 = vld [vmem:[%s251 + $0xa0] sm:$0xff]
      %v295 = vld [vmem:[%s251 + $0xa8] sm:$0xff]
      %v296 = vld [vmem:[%s251 + $0xb0] sm:$0xff]
      %v297 = vld [vmem:[%s251 + $0xb8] sm:$0xff]
      %v298 = vld [vmem:[%s251 + $0xc0] sm:$0xff]
      %v299 = vld [vmem:[%s251 + $0xc8] sm:$0xff]
      %v300 = vld [vmem:[%s251 + $0xd0] sm:$0xff]
      %v301 = vld [vmem:[%s251 + $0xd8] sm:$0xff]
      %v302 = vld [vmem:[%s251 + $0xe0] sm:$0xff]
      %v303 = vld [vmem:[%s251 + $0xe8] sm:$0xff]
      %v304 = vld [vmem:[%s251 + $0xf0] sm:$0xff]
      %v305 = vld [vmem:[%s251 + $0xf8] sm:$0xff]
      %v306 = vld [vmem:[%s251 + $0x100] sm:$0xff]
      %v307 = vld [vmem:[%s251 + $0x108] sm:$0xff]
      %v308 = vld [vmem:[%s251 + $0x110] sm:$0xff]
      %v309 = vld [vmem:[%s251 + $0x118] sm:$0xff]
      %v310 = vld [vmem:[%s251 + $0x120] sm:$0xff]
      %v311 = vld [vmem:[%s251 + $0x128] sm:$0xff]
      %v312 = vld [vmem:[%s251 + $0x130] sm:$0xff]
      %v313 = vld [vmem:[%s251 + $0x138] sm:$0xff]
      %v314 = vld [vmem:[%s251 + $0x140] sm:$0xff]
      %v315 = vld [vmem:[%s251 + $0x148] sm:$0xff]
      %v316 = vld [vmem:[%s251 + $0x150] sm:$0xff]
      %v317 = vld [vmem:[%s251 + $0x158] sm:$0xff]
      %v318 = vld [vmem:[%s251 + $0x160] sm:$0xff]
      %v319 = vld [vmem:[%s251 + $0x168] sm:$0xff]
      %v320 = vld [vmem:[%s251 + $0x170] sm:$0xff]
      %v321 = vld [vmem:[%s251 + $0x178] sm:$0xff]
      %v322 = vld [vmem:[%s251 + $0x180] sm:$0xff]
      %v323 = vld [vmem:[%s251 + $0x188] sm:$0xff]
      %v324 = vld [vmem:[%s251 + $0x190] sm:$0xff]
      %v325 = vld [vmem:[%s251 + $0x198] sm:$0xff]
      %v326 = vld [vmem:[%s251 + $0x1a0] sm:$0xff]
      %v327 = vld [vmem:[%s251 + $0x1a8] sm:$0xff]
      %v328 = vld [vmem:[%s251 + $0x1b0] sm:$0xff]
      %v329 = vld [vmem:[%s251 + $0x1b8] sm:$0xff]
      %v330 = vld [vmem:[%s251 + $0x1c0] sm:$0xff]
      %v331 = vld [vmem:[%s251 + $0x1c8] sm:$0xff]
      %v332 = vld [vmem:[%s251 + $0x1d0] sm:$0xff]
      %v333 = vld [vmem:[%s251 + $0x1d8] sm:$0xff]
      %v334 = vld [vmem:[%s251 + $0x1e0] sm:$0xff]
      %v335 = vld [vmem:[%s251 + $0x1e8] sm:$0xff]
      %v336 = vld [vmem:[%s251 + $0x1f0] sm:$0xff]
      %v337 = vld [vmem:[%s251 + $0x1f8] sm:$0xff]
      %v338 = vadd.f32 %v274, %v275
      %339 = vadd.xlane.f32.xlu0 %v338
      %v340 = vpop.xlane.xlu0 %339
      %v341 = vadd.f32 %v276, %v277
      %342 = vadd.xlane.f32.xlu0 %v341
      %v343 = vpop.xlane.xlu0 %342
      %v344 = vadd.f32 %v278, %v279
      %345 = vadd.xlane.f32.xlu0 %v344
      %v346 = vpop.xlane.xlu0 %345
      %v347 = vadd.f32 %v280, %v281
      %348 = vadd.xlane.f32.xlu0 %v347
      %v349 = vpop.xlane.xlu0 %348
      %v350 = vadd.f32 %v282, %v283
      %351 = vadd.xlane.f32.xlu0 %v350
      %v352 = vpop.xlane.xlu0 %351
      %v353 = vadd.f32 %v284, %v285
      %354 = vadd.xlane.f32.xlu0 %v353
      %v355 = vpop.xlane.xlu0 %354
      %v356 = vadd.f32 %v286, %v287
      %357 = vadd.xlane.f32.xlu0 %v356
      %v358 = vpop.xlane.xlu0 %357
      %v359 = vadd.f32 %v288, %v289
      %360 = vadd.xlane.f32.xlu0 %v359
      %v361 = vpop.xlane.xlu0 %360
      %v362 = vadd.f32 %v290, %v291
      %363 = vadd.xlane.f32.xlu0 %v362
      %v364 = vpop.xlane.xlu0 %363
      %v365 = vadd.f32 %v292, %v293
      %366 = vadd.xlane.f32.xlu0 %v365
      %v367 = vpop.xlane.xlu0 %366
      %v368 = vadd.f32 %v294, %v295
      %369 = vadd.xlane.f32.xlu0 %v368
      %v370 = vpop.xlane.xlu0 %369
      %v371 = vadd.f32 %v296, %v297
      %372 = vadd.xlane.f32.xlu0 %v371
      %v373 = vpop.xlane.xlu0 %372
      %v374 = vadd.f32 %v298, %v299
      %375 = vadd.xlane.f32.xlu0 %v374
      %v376 = vpop.xlane.xlu0 %375
      %v377 = vadd.f32 %v300, %v301
      %378 = vadd.xlane.f32.xlu0 %v377
      %v379 = vpop.xlane.xlu0 %378
      %v380 = vadd.f32 %v302, %v303
      %381 = vadd.xlane.f32.xlu0 %v380
      %v382 = vpop.xlane.xlu0 %381
      %v383 = vadd.f32 %v304, %v305
      %384 = vadd.xlane.f32.xlu0 %v383
      %v385 = vpop.xlane.xlu0 %384
      %v386 = vadd.f32 %v306, %v307
      %387 = vadd.xlane.f32.xlu0 %v386
      %v388 = vpop.xlane.xlu0 %387
      %v389 = vadd.f32 %v308, %v309
      %390 = vadd.xlane.f32.xlu0 %v389
      %v391 = vpop.xlane.xlu0 %390
      %v392 = vadd.f32 %v310, %v311
      %393 = vadd.xlane.f32.xlu0 %v392
      %v394 = vpop.xlane.xlu0 %393
      %v395 = vadd.f32 %v312, %v313
      %396 = vadd.xlane.f32.xlu0 %v395
      %v397 = vpop.xlane.xlu0 %396
      %v398 = vadd.f32 %v314, %v315
      %399 = vadd.xlane.f32.xlu0 %v398
      %v400 = vpop.xlane.xlu0 %399
      %v401 = vadd.f32 %v316, %v317
      %402 = vadd.xlane.f32.xlu0 %v401
      %v403 = vpop.xlane.xlu0 %402
      %v404 = vadd.f32 %v318, %v319
      %405 = vadd.xlane.f32.xlu0 %v404
      %v406 = vpop.xlane.xlu0 %405
      %v407 = vadd.f32 %v320, %v321
      %408 = vadd.xlane.f32.xlu0 %v407
      %v409 = vpop.xlane.xlu0 %408
      %v410 = vadd.f32 %v322, %v323
      %411 = vadd.xlane.f32.xlu0 %v410
      %v412 = vpop.xlane.xlu0 %411
      %v413 = vadd.f32 %v324, %v325
      %414 = vadd.xlane.f32.xlu0 %v413
      %v415 = vpop.xlane.xlu0 %414
      %v416 = vadd.f32 %v326, %v327
      %417 = vadd.xlane.f32.xlu0 %v416
      %v418 = vpop.xlane.xlu0 %417
      %v419 = vadd.f32 %v328, %v329
      %420 = vadd.xlane.f32.xlu0 %v419
      %v421 = vpop.xlane.xlu0 %420
      %v422 = vadd.f32 %v330, %v331
      %423 = vadd.xlane.f32.xlu0 %v422
      %v424 = vpop.xlane.xlu0 %423
      %v425 = vadd.f32 %v332, %v333
      %426 = vadd.xlane.f32.xlu0 %v425
      %v427 = vpop.xlane.xlu0 %426
      %v428 = vadd.f32 %v334, %v335
      %429 = vadd.xlane.f32.xlu0 %v428
      %v430 = vpop.xlane.xlu0 %429
      %v431 = vadd.f32 %v336, %v337
      %432 = vadd.xlane.f32.xlu0 %v431
      %v433 = vpop.xlane.xlu0 %432
      %v434 = vmul.f32 %v340, 0.00390625
      %v435 = vmul.f32 %v343, 0.00390625
      %v436 = vmul.f32 %v346, 0.00390625
      %v437 = vmul.f32 %v349, 0.00390625
      %v438 = vmul.f32 %v352, 0.00390625
      %v439 = vmul.f32 %v355, 0.00390625
      %v440 = vmul.f32 %v358, 0.00390625
      %v441 = vmul.f32 %v361, 0.00390625
      %v442 = vmul.f32 %v364, 0.00390625
      %v443 = vmul.f32 %v367, 0.00390625
      %v444 = vmul.f32 %v370, 0.00390625
      %v445 = vmul.f32 %v373, 0.00390625
      %v446 = vmul.f32 %v376, 0.00390625
      %v447 = vmul.f32 %v379, 0.00390625
      %v448 = vmul.f32 %v382, 0.00390625
      %v449 = vmul.f32 %v385, 0.00390625
      %v450 = vmul.f32 %v388, 0.00390625
      %v451 = vmul.f32 %v391, 0.00390625
      %v452 = vmul.f32 %v394, 0.00390625
      %v453 = vmul.f32 %v397, 0.00390625
      %v454 = vmul.f32 %v400, 0.00390625
      %v455 = vmul.f32 %v403, 0.00390625
      %v456 = vmul.f32 %v406, 0.00390625
      %v457 = vmul.f32 %v409, 0.00390625
      %v458 = vmul.f32 %v412, 0.00390625
      %v459 = vmul.f32 %v415, 0.00390625
      %v460 = vmul.f32 %v418, 0.00390625
      %v461 = vmul.f32 %v421, 0.00390625
      %v462 = vmul.f32 %v424, 0.00390625
      %v463 = vmul.f32 %v427, 0.00390625
      %v464 = vmul.f32 %v430, 0.00390625
      %v465 = vmul.f32 %v433, 0.00390625
      %v466 = vld [vmem:[%s258] sm:$0xff]
      %v467 = vld [vmem:[%s258 + $0x8] sm:$0xff]
      %v468 = vld [vmem:[%s258 + $0x10] sm:$0xff]
      %v469 = vld [vmem:[%s258 + $0x18] sm:$0xff]
      %v470 = vld [vmem:[%s258 + $0x20] sm:$0xff]
      %v471 = vld [vmem:[%s258 + $0x28] sm:$0xff]
      %v472 = vld [vmem:[%s258 + $0x30] sm:$0xff]
      %v473 = vld [vmem:[%s258 + $0x38] sm:$0xff]
      %v474 = vld [vmem:[%s258 + $0x40] sm:$0xff]
      %v475 = vld [vmem:[%s258 + $0x48] sm:$0xff]
      %v476 = vld [vmem:[%s258 + $0x50] sm:$0xff]
      %v477 = vld [vmem:[%s258 + $0x58] sm:$0xff]
      %v478 = vld [vmem:[%s258 + $0x60] sm:$0xff]
      %v479 = vld [vmem:[%s258 + $0x68] sm:$0xff]
      %v480 = vld [vmem:[%s258 + $0x70] sm:$0xff]
      %v481 = vld [vmem:[%s258 + $0x78] sm:$0xff]
      %v482 = vld [vmem:[%s258 + $0x80] sm:$0xff]
      %v483 = vld [vmem:[%s258 + $0x88] sm:$0xff]
      %v484 = vld [vmem:[%s258 + $0x90] sm:$0xff]
      %v485 = vld [vmem:[%s258 + $0x98] sm:$0xff]
      %v486 = vld [vmem:[%s258 + $0xa0] sm:$0xff]
      %v487 = vld [vmem:[%s258 + $0xa8] sm:$0xff]
      %v488 = vld [vmem:[%s258 + $0xb0] sm:$0xff]
      %v489 = vld [vmem:[%s258 + $0xb8] sm:$0xff]
      %v490 = vld [vmem:[%s258 + $0xc0] sm:$0xff]
      %v491 = vld [vmem:[%s258 + $0xc8] sm:$0xff]
      %v492 = vld [vmem:[%s258 + $0xd0] sm:$0xff]
      %v493 = vld [vmem:[%s258 + $0xd8] sm:$0xff]
      %v494 = vld [vmem:[%s258 + $0xe0] sm:$0xff]
      %v495 = vld [vmem:[%s258 + $0xe8] sm:$0xff]
      %v496 = vld [vmem:[%s258 + $0xf0] sm:$0xff]
      %v497 = vld [vmem:[%s258 + $0xf8] sm:$0xff]
      %v498 = vld [vmem:[%s258 + $0x100] sm:$0xff]
      %v499 = vld [vmem:[%s258 + $0x108] sm:$0xff]
      %v500 = vld [vmem:[%s258 + $0x110] sm:$0xff]
      %v501 = vld [vmem:[%s258 + $0x118] sm:$0xff]
      %v502 = vld [vmem:[%s258 + $0x120] sm:$0xff]
      %v503 = vld [vmem:[%s258 + $0x128] sm:$0xff]
      %v504 = vld [vmem:[%s258 + $0x130] sm:$0xff]
      %v505 = vld [vmem:[%s258 + $0x138] sm:$0xff]
      %v506 = vld [vmem:[%s258 + $0x140] sm:$0xff]
      %v507 = vld [vmem:[%s258 + $0x148] sm:$0xff]
      %v508 = vld [vmem:[%s258 + $0x150] sm:$0xff]
      %v509 = vld [vmem:[%s258 + $0x158] sm:$0xff]
      %v510 = vld [vmem:[%s258 + $0x160] sm:$0xff]
      %v511 = vld [vmem:[%s258 + $0x168] sm:$0xff]
      %v512 = vld [vmem:[%s258 + $0x170] sm:$0xff]
      %v513 = vld [vmem:[%s258 + $0x178] sm:$0xff]
      %v514 = vld [vmem:[%s258 + $0x180] sm:$0xff]
      %v515 = vld [vmem:[%s258 + $0x188] sm:$0xff]
      %v516 = vld [vmem:[%s258 + $0x190] sm:$0xff]
      %v517 = vld [vmem:[%s258 + $0x198] sm:$0xff]
      %v518 = vld [vmem:[%s258 + $0x1a0] sm:$0xff]
      %v519 = vld [vmem:[%s258 + $0x1a8] sm:$0xff]
      %v520 = vld [vmem:[%s258 + $0x1b0] sm:$0xff]
      %v521 = vld [vmem:[%s258 + $0x1b8] sm:$0xff]
      %v522 = vld [vmem:[%s258 + $0x1c0] sm:$0xff]
      %v523 = vld [vmem:[%s258 + $0x1c8] sm:$0xff]
      %v524 = vld [vmem:[%s258 + $0x1d0] sm:$0xff]
      %v525 = vld [vmem:[%s258 + $0x1d8] sm:$0xff]
      %v526 = vld [vmem:[%s258 + $0x1e0] sm:$0xff]
      %v527 = vld [vmem:[%s258 + $0x1e8] sm:$0xff]
      %v528 = vld [vmem:[%s258 + $0x1f0] sm:$0xff]
      %v529 = vld [vmem:[%s258 + $0x1f8] sm:$0xff]
      %v530 = vadd.f32 %v466, %v467
      %531 = vadd.xlane.f32.xlu0 %v530
      %v532 = vpop.xlane.xlu0 %531
      %v533 = vadd.f32 %v468, %v469
      %534 = vadd.xlane.f32.xlu0 %v533
      %v535 = vpop.xlane.xlu0 %534
      %v536 = vadd.f32 %v470, %v471
      %537 = vadd.xlane.f32.xlu0 %v536
      %v538 = vpop.xlane.xlu0 %537
      %v539 = vadd.f32 %v472, %v473
      %540 = vadd.xlane.f32.xlu0 %v539
      %v541 = vpop.xlane.xlu0 %540
      %v542 = vadd.f32 %v474, %v475
      %543 = vadd.xlane.f32.xlu0 %v542
      %v544 = vpop.xlane.xlu0 %543
      %v545 = vadd.f32 %v476, %v477
      %546 = vadd.xlane.f32.xlu0 %v545
      %v547 = vpop.xlane.xlu0 %546
      %v548 = vadd.f32 %v478, %v479
      %549 = vadd.xlane.f32.xlu0 %v548
      %v550 = vpop.xlane.xlu0 %549
      %v551 = vadd.f32 %v480, %v481
      %552 = vadd.xlane.f32.xlu0 %v551
      %v553 = vpop.xlane.xlu0 %552
      %v554 = vadd.f32 %v482, %v483
      %555 = vadd.xlane.f32.xlu0 %v554
      %v556 = vpop.xlane.xlu0 %555
      %v557 = vadd.f32 %v484, %v485
      %558 = vadd.xlane.f32.xlu0 %v557
      %v559 = vpop.xlane.xlu0 %558
      %v560 = vadd.f32 %v486, %v487
      %561 = vadd.xlane.f32.xlu0 %v560
      %v562 = vpop.xlane.xlu0 %561
      %v563 = vadd.f32 %v488, %v489
      %564 = vadd.xlane.f32.xlu0 %v563
      %v565 = vpop.xlane.xlu0 %564
      %v566 = vadd.f32 %v490, %v491
      %567 = vadd.xlane.f32.xlu0 %v566
      %v568 = vpop.xlane.xlu0 %567
      %v569 = vadd.f32 %v492, %v493
      %570 = vadd.xlane.f32.xlu0 %v569
      %v571 = vpop.xlane.xlu0 %570
      %v572 = vadd.f32 %v494, %v495
      %573 = vadd.xlane.f32.xlu0 %v572
      %v574 = vpop.xlane.xlu0 %573
      %v575 = vadd.f32 %v496, %v497
      %576 = vadd.xlane.f32.xlu0 %v575
      %v577 = vpop.xlane.xlu0 %576
      %v578 = vadd.f32 %v498, %v499
      %579 = vadd.xlane.f32.xlu0 %v578
      %v580 = vpop.xlane.xlu0 %579
      %v581 = vadd.f32 %v500, %v501
      %582 = vadd.xlane.f32.xlu0 %v581
      %v583 = vpop.xlane.xlu0 %582
      %v584 = vadd.f32 %v502, %v503
      %585 = vadd.xlane.f32.xlu0 %v584
      %v586 = vpop.xlane.xlu0 %585
      %v587 = vadd.f32 %v504, %v505
      %588 = vadd.xlane.f32.xlu0 %v587
      %v589 = vpop.xlane.xlu0 %588
      %v590 = vadd.f32 %v506, %v507
      %591 = vadd.xlane.f32.xlu0 %v590
      %v592 = vpop.xlane.xlu0 %591
      %v593 = vadd.f32 %v508, %v509
      %594 = vadd.xlane.f32.xlu0 %v593
      %v595 = vpop.xlane.xlu0 %594
      %v596 = vadd.f32 %v510, %v511
      %597 = vadd.xlane.f32.xlu0 %v596
      %v598 = vpop.xlane.xlu0 %597
      %v599 = vadd.f32 %v512, %v513
      %600 = vadd.xlane.f32.xlu0 %v599
      %v601 = vpop.xlane.xlu0 %600
      %v602 = vadd.f32 %v514, %v515
      %603 = vadd.xlane.f32.xlu0 %v602
      %v604 = vpop.xlane.xlu0 %603
      %v605 = vadd.f32 %v516, %v517
      %606 = vadd.xlane.f32.xlu0 %v605
      %v607 = vpop.xlane.xlu0 %606
      %v608 = vadd.f32 %v518, %v519
      %609 = vadd.xlane.f32.xlu0 %v608
      %v610 = vpop.xlane.xlu0 %609
      %v611 = vadd.f32 %v520, %v521
      %612 = vadd.xlane.f32.xlu0 %v611
      %v613 = vpop.xlane.xlu0 %612
      %v614 = vadd.f32 %v522, %v523
      %615 = vadd.xlane.f32.xlu0 %v614
      %v616 = vpop.xlane.xlu0 %615
      %v617 = vadd.f32 %v524, %v525
      %618 = vadd.xlane.f32.xlu0 %v617
      %v619 = vpop.xlane.xlu0 %618
      %v620 = vadd.f32 %v526, %v527
      %621 = vadd.xlane.f32.xlu0 %v620
      %v622 = vpop.xlane.xlu0 %621
      %v623 = vadd.f32 %v528, %v529
      %624 = vadd.xlane.f32.xlu0 %v623
      %v625 = vpop.xlane.xlu0 %624
      %v626 = vmul.f32 %v532, 0.00390625
      %v627 = vmul.f32 %v535, 0.00390625
      %v628 = vmul.f32 %v538, 0.00390625
      %v629 = vmul.f32 %v541, 0.00390625
      %v630 = vmul.f32 %v544, 0.00390625
      %v631 = vmul.f32 %v547, 0.00390625
      %v632 = vmul.f32 %v550, 0.00390625
      %v633 = vmul.f32 %v553, 0.00390625
      %v634 = vmul.f32 %v556, 0.00390625
      %v635 = vmul.f32 %v559, 0.00390625
      %v636 = vmul.f32 %v562, 0.00390625
      %v637 = vmul.f32 %v565, 0.00390625
      %v638 = vmul.f32 %v568, 0.00390625
      %v639 = vmul.f32 %v571, 0.00390625
      %v640 = vmul.f32 %v574, 0.00390625
      %v641 = vmul.f32 %v577, 0.00390625
      %v642 = vmul.f32 %v580, 0.00390625
      %v643 = vmul.f32 %v583, 0.00390625
      %v644 = vmul.f32 %v586, 0.00390625
      %v645 = vmul.f32 %v589, 0.00390625
      %v646 = vmul.f32 %v592, 0.00390625
      %v647 = vmul.f32 %v595, 0.00390625
      %v648 = vmul.f32 %v598, 0.00390625
      %v649 = vmul.f32 %v601, 0.00390625
      %v650 = vmul.f32 %v604, 0.00390625
      %v651 = vmul.f32 %v607, 0.00390625
      %v652 = vmul.f32 %v610, 0.00390625
      %v653 = vmul.f32 %v613, 0.00390625
      %v654 = vmul.f32 %v616, 0.00390625
      %v655 = vmul.f32 %v619, 0.00390625
      %v656 = vmul.f32 %v622, 0.00390625
      %v657 = vmul.f32 %v625, 0.00390625
      %v690 = vlaneseq
      %v691 = vand.u32 %v690, 127
      %v692 = vperm.slane %v434, %v691
      %v693 = vadd.s32 %v691, 4294967288
      %v694 = vperm.slane %v435, %v693
      %vm695 = vcmask 130112
      %v696 = vsel %vm695, %v694, %v692
      %v697 = vadd.s32 %v691, 4294967280
      %v698 = vperm.slane %v436, %v697
      %vm699 = vcmask 195712
      %v700 = vsel %vm699, %v698, %v696
      %v701 = vadd.s32 %v691, 4294967272
      %v702 = vperm.slane %v437, %v701
      %vm703 = vcmask 261312
      %v704 = vsel %vm703, %v702, %v700
      %v705 = vadd.s32 %v691, 4294967264
      %v706 = vperm.slane %v438, %v705
      %vm707 = vcmask 326912
      %v708 = vsel %vm707, %v706, %v704
      %v709 = vadd.s32 %v691, 4294967256
      %v710 = vperm.slane %v439, %v709
      %vm711 = vcmask 392512
      %v712 = vsel %vm711, %v710, %v708
      %v713 = vadd.s32 %v691, 4294967248
      %v714 = vperm.slane %v440, %v713
      %vm715 = vcmask 458112
      %v716 = vsel %vm715, %v714, %v712
      %v717 = vadd.s32 %v691, 4294967240
      %v718 = vperm.slane %v441, %v717
      %vm719 = vcmask 523712
      %v720 = vsel %vm719, %v718, %v716
      %v721 = vperm.slane %v442, %v691
      %v722 = vperm.slane %v443, %v693
      %v723 = vsel %vm695, %v722, %v721
      %v724 = vperm.slane %v444, %v697
      %v725 = vsel %vm699, %v724, %v723
      %v726 = vperm.slane %v445, %v701
      %v727 = vsel %vm703, %v726, %v725
      %v728 = vperm.slane %v446, %v705
      %v729 = vsel %vm707, %v728, %v727
      %v730 = vperm.slane %v447, %v709
      %v731 = vsel %vm711, %v730, %v729
      %v732 = vperm.slane %v448, %v713
      %v733 = vsel %vm715, %v732, %v731
      %v734 = vperm.slane %v449, %v717
      %v735 = vsel %vm719, %v734, %v733
      %v736 = vperm.slane %v450, %v691
      %v737 = vperm.slane %v451, %v693
      %v738 = vsel %vm695, %v737, %v736
      %v739 = vperm.slane %v452, %v697
      %v740 = vsel %vm699, %v739, %v738
      %v741 = vperm.slane %v453, %v701
      %v742 = vsel %vm703, %v741, %v740
      %v743 = vperm.slane %v454, %v705
      %v744 = vsel %vm707, %v743, %v742
      %v745 = vperm.slane %v455, %v709
      %v746 = vsel %vm711, %v745, %v744
      %v747 = vperm.slane %v456, %v713
      %v748 = vsel %vm715, %v747, %v746
      %v749 = vperm.slane %v457, %v717
      %v750 = vsel %vm719, %v749, %v748
      %v751 = vperm.slane %v458, %v691
      %v752 = vperm.slane %v459, %v693
      %v753 = vsel %vm695, %v752, %v751
      %v754 = vperm.slane %v460, %v697
      %v755 = vsel %vm699, %v754, %v753
      %v756 = vperm.slane %v461, %v701
      %v757 = vsel %vm703, %v756, %v755
      %v758 = vperm.slane %v462, %v705
      %v759 = vsel %vm707, %v758, %v757
      %v760 = vperm.slane %v463, %v709
      %v761 = vsel %vm711, %v760, %v759
      %v762 = vperm.slane %v464, %v713
      %v763 = vsel %vm715, %v762, %v761
      %v764 = vperm.slane %v465, %v717
      %v765 = vsel %vm719, %v764, %v763
      %vm766 = vcmask 1041409
      %v767 = vsel %vm766, %v735, %v720
      %vm768 = vcmask 1042434
      %v769 = vsel %vm768, %v750, %v767
      %vm770 = vcmask 1043459
      %v771 = vsel %vm770, %v765, %v769
      %v805 = vadd.s32 %v691, 4294967232
      %v806 = vperm.slane %v626, %v805
      %v807 = vadd.s32 %v691, 4294967224
      %v808 = vperm.slane %v627, %v807
      %vm809 = vcmask 654912
      %v810 = vsel %vm809, %v808, %v806
      %v811 = vadd.s32 %v691, 4294967216
      %v812 = vperm.slane %v628, %v811
      %vm813 = vcmask 720512
      %v814 = vsel %vm813, %v812, %v810
      %v815 = vadd.s32 %v691, 4294967208
      %v816 = vperm.slane %v629, %v815
      %vm817 = vcmask 786112
      %v818 = vsel %vm817, %v816, %v814
      %v819 = vadd.s32 %v691, 4294967200
      %v820 = vperm.slane %v630, %v819
      %vm821 = vcmask 851712
      %v822 = vsel %vm821, %v820, %v818
      %v823 = vadd.s32 %v691, 4294967192
      %v824 = vperm.slane %v631, %v823
      %vm825 = vcmask 917312
      %v826 = vsel %vm825, %v824, %v822
      %v827 = vadd.s32 %v691, 4294967184
      %v828 = vperm.slane %v632, %v827
      %vm829 = vcmask 982912
      %v830 = vsel %vm829, %v828, %v826
      %v831 = vadd.s32 %v691, 4294967176
      %v832 = vperm.slane %v633, %v831
      %vm833 = vcmask 1048512
      %v834 = vsel %vm833, %v832, %v830
      %v835 = vperm.slane %v634, %v805
      %v836 = vperm.slane %v635, %v807
      %v837 = vsel %vm809, %v836, %v835
      %v838 = vperm.slane %v636, %v811
      %v839 = vsel %vm813, %v838, %v837
      %v840 = vperm.slane %v637, %v815
      %v841 = vsel %vm817, %v840, %v839
      %v842 = vperm.slane %v638, %v819
      %v843 = vsel %vm821, %v842, %v841
      %v844 = vperm.slane %v639, %v823
      %v845 = vsel %vm825, %v844, %v843
      %v846 = vperm.slane %v640, %v827
      %v847 = vsel %vm829, %v846, %v845
      %v848 = vperm.slane %v641, %v831
      %v849 = vsel %vm833, %v848, %v847
      %v850 = vperm.slane %v642, %v805
      %v851 = vperm.slane %v643, %v807
      %v852 = vsel %vm809, %v851, %v850
      %v853 = vperm.slane %v644, %v811
      %v854 = vsel %vm813, %v853, %v852
      %v855 = vperm.slane %v645, %v815
      %v856 = vsel %vm817, %v855, %v854
      %v857 = vperm.slane %v646, %v819
      %v858 = vsel %vm821, %v857, %v856
      %v859 = vperm.slane %v647, %v823
      %v860 = vsel %vm825, %v859, %v858
      %v861 = vperm.slane %v648, %v827
      %v862 = vsel %vm829, %v861, %v860
      %v863 = vperm.slane %v649, %v831
      %v864 = vsel %vm833, %v863, %v862
      %v865 = vperm.slane %v650, %v805
      %v866 = vperm.slane %v651, %v807
      %v867 = vsel %vm809, %v866, %v865
      %v868 = vperm.slane %v652, %v811
      %v869 = vsel %vm813, %v868, %v867
      %v870 = vperm.slane %v653, %v815
      %v871 = vsel %vm817, %v870, %v869
      %v872 = vperm.slane %v654, %v819
      %v873 = vsel %vm821, %v872, %v871
      %v874 = vperm.slane %v655, %v823
      %v875 = vsel %vm825, %v874, %v873
      %v876 = vperm.slane %v656, %v827
      %v877 = vsel %vm829, %v876, %v875
      %v878 = vperm.slane %v657, %v831
      %v879 = vsel %vm833, %v878, %v877
      %v880 = vsel %vm766, %v849, %v834
      %v881 = vsel %vm768, %v864, %v880
      %v882 = vsel %vm770, %v879, %v881
      %vm884 = vcmask 523264
      %v885 = vsel %vm884, %v771, %v882
      %v886 = vld [vmem:[%s2] sm:$0xff]
      %v887 = vld [vmem:[%s2 + $0x8] sm:$0xff]
      %v888 = vld [vmem:[%s2 + $0x10] sm:$0xff]
      %v889 = vld [vmem:[%s2 + $0x18] sm:$0xff]
      %v890 = vld [vmem:[%s2 + $0x20] sm:$0xff]
      %v891 = vld [vmem:[%s2 + $0x28] sm:$0xff]
      %v892 = vld [vmem:[%s2 + $0x30] sm:$0xff]
      %v893 = vld [vmem:[%s2 + $0x38] sm:$0xff]
      %v894 = vld [vmem:[%s2 + $0x40] sm:$0xff]
      %v895 = vld [vmem:[%s2 + $0x48] sm:$0xff]
      %v896 = vld [vmem:[%s2 + $0x50] sm:$0xff]
      %v897 = vld [vmem:[%s2 + $0x58] sm:$0xff]
      %v898 = vld [vmem:[%s2 + $0x60] sm:$0xff]
      %v899 = vld [vmem:[%s2 + $0x68] sm:$0xff]
      %v900 = vld [vmem:[%s2 + $0x70] sm:$0xff]
      %v901 = vld [vmem:[%s2 + $0x78] sm:$0xff]
      %902 = vmatpush.msra.mxu0 %v901
      %903 = vmatpush.msra.mxu0 %v900
      %904 = vmatpush.msra.mxu0 %v899
      %905 = vmatpush.msra.mxu0 %v898
      %906 = vmatpush.msra.mxu0 %v897
      %907 = vmatpush.msra.mxu0 %v896
      %908 = vmatpush.msra.mxu0 %v895
      %909 = vmatpush.msra.mxu0 %v894
      %910 = vmatpush.msra.mxu0 %v893
      %911 = vmatpush.msra.mxu0 %v892
      %912 = vmatpush.msra.mxu0 %v891
      %913 = vmatpush.msra.mxu0 %v890
      %914 = vmatpush.msra.mxu0 %v889
      %915 = vmatpush.msra.mxu0 %v888
      %916 = vmatpush.msra.mxu0 %v887
      %917 = vmatpush.msra.mxu0 %v886
      %918 = vmatmul.f32.gmra.mxu0 %v885
      %v919 = vpop.f32.mrf.mxu0
      %v920 = vadd.f32 0.0, %v919
      %921 = vdwg.mxu0
      %v922 = vmax.f32 %v920, 0.0
      %v923 = vld [vmem:[%s3] sm:$0xff]
      %v924 = vld [vmem:[%s3 + $0x8] sm:$0xff]
      %vm925 = vcmask 130048
      %v927 = vsel %vm925, %v922, 0
      %929 = vmatpush.msra.mxu0 0.0
      %930 = vmatpush.msra.mxu0 0.0
      %931 = vmatpush.msra.mxu0 0.0
      %932 = vmatpush.msra.mxu0 0.0
      %933 = vmatpush.msra.mxu0 0.0
      %934 = vmatpush.msra.mxu0 0.0
      %935 = vmatpush.msra.mxu0 0.0
      %936 = vmatpush.msra.mxu0 0.0
      %937 = vmatpush.msra.mxu0 0.0
      %938 = vmatpush.msra.mxu0 0.0
      %939 = vmatpush.msra.mxu0 0.0
      %940 = vmatpush.msra.mxu0 0.0
      %941 = vmatpush.msra.mxu0 0.0
      %942 = vmatpush.msra.mxu0 0.0
      %943 = vmatpush.msra.mxu0 %v924
      %944 = vmatpush.msra.mxu0 %v923
      %945 = vmatmul.f32.gmra.mxu0 %v927
      %v946 = vpop.f32.mrf.mxu0
      %v947 = vadd.f32 0.0, %v946
      %948 = vdwg.mxu0
      %950 = vrot.lane.b32.xlu0 %v947, 64
      %v951 = vpop.permute.xlu0 %950
      %v953 = vsub.f32 %v947, %v951
      %v954 = vmul.f32 %v953, 1.442695
      %v955 = vpow.pop %v954
      %v956 = vadd.f32 %v955, 1.0
      %v957 = vrcp.pop %v956
      %v958 = vmul.f32 %v956, %v957
      %v959 = vsub.f32 1.0, %v958
      %v960 = vmul.f32 %v957, %v959
      %v961 = vadd.f32 %v957, %v960
      %vm962 = vweird.f32 %v956
      %vm963 = vweird.f32 %v957
      %vm964 = vmor %vm962, %vm963
      %v965 = vsel %vm964, %v957, %v961
      %v966 = vand.u32 2147483647, %v956
      %vm967 = vcmp.eq.f32.partialorder %v966, 8.507059e+37
      %v968 = vand.u32 %v956, 2147483648
      %v969 = vor.u32 1.1754944e-38, %v968
      %v970 = vsel %vm967, %v969, %v965
      %v971 = vsub.f32 1.0, %v970
      %v972 = vperm.slane %v970, 0
      %v973 = vlaneseq
      %v974 = vshrl.u32 %v973, 7
      %v975 = vadd.s32 %v974, 64
      %976 = vset.pattern.permute.xlu0 %v975
      %977 = vperm.xlu0 %976, %v972
      %v978 = vpop.permute.xlu0 %977
      %v979 = vlaneseq
      %v980 = vshrl.u32 %v979, 7
      %v981 = vadd.s32 %v980, 72
      %982 = vset.pattern.permute.xlu0 %v981
      %983 = vperm.xlu0 %982, %v972
      %v984 = vpop.permute.xlu0 %983
      %v985 = vlaneseq
      %v986 = vshrl.u32 %v985, 7
      %v987 = vadd.s32 %v986, 80
      %988 = vset.pattern.permute.xlu0 %v987
      %989 = vperm.xlu0 %988, %v972
      %v990 = vpop.permute.xlu0 %989
      %v991 = vlaneseq
      %v992 = vshrl.u32 %v991, 7
      %v993 = vadd.s32 %v992, 88
      %994 = vset.pattern.permute.xlu0 %v993
      %995 = vperm.xlu0 %994, %v972
      %v996 = vpop.permute.xlu0 %995
      %v997 = vlaneseq
      %v998 = vshrl.u32 %v997, 7
      %v999 = vadd.s32 %v998, 96
      %1000 = vset.pattern.permute.xlu0 %v999
      %1001 = vperm.xlu0 %1000, %v972
      %v1002 = vpop.permute.xlu0 %1001
      %v1003 = vlaneseq
      %v1004 = vshrl.u32 %v1003, 7
      %v1005 = vadd.s32 %v1004, 104
      %1006 = vset.pattern.permute.xlu0 %v1005
      %1007 = vperm.xlu0 %1006, %v972
      %v1008 = vpop.permute.xlu0 %1007
      %v1009 = vlaneseq
      %v1010 = vshrl.u32 %v1009, 7
      %v1011 = vadd.s32 %v1010, 112
      %1012 = vset.pattern.permute.xlu0 %v1011
      %1013 = vperm.xlu0 %1012, %v972
      %v1014 = vpop.permute.xlu0 %1013
      %v1015 = vlaneseq
      %v1016 = vshrl.u32 %v1015, 7
      %v1017 = vadd.s32 %v1016, 120
      %1018 = vset.pattern.permute.xlu0 %v1017
      %1019 = vperm.xlu0 %1018, %v972
      %v1020 = vpop.permute.xlu0 %1019
      %v1021 = vperm.slane %v970, 1
      %v1022 = vlaneseq
      %v1023 = vshrl.u32 %v1022, 7
      %v1024 = vadd.s32 %v1023, 64
      %1025 = vset.pattern.permute.xlu0 %v1024
      %1026 = vperm.xlu0 %1025, %v1021
      %v1027 = vpop.permute.xlu0 %1026
      %v1028 = vlaneseq
      %v1029 = vshrl.u32 %v1028, 7
      %v1030 = vadd.s32 %v1029, 72
      %1031 = vset.pattern.permute.xlu0 %v1030
      %1032 = vperm.xlu0 %1031, %v1021
      %v1033 = vpop.permute.xlu0 %1032
      %v1034 = vlaneseq
      %v1035 = vshrl.u32 %v1034, 7
      %v1036 = vadd.s32 %v1035, 80
      %1037 = vset.pattern.permute.xlu0 %v1036
      %1038 = vperm.xlu0 %1037, %v1021
      %v1039 = vpop.permute.xlu0 %1038
      %v1040 = vlaneseq
      %v1041 = vshrl.u32 %v1040, 7
      %v1042 = vadd.s32 %v1041, 88
      %1043 = vset.pattern.permute.xlu0 %v1042
      %1044 = vperm.xlu0 %1043, %v1021
      %v1045 = vpop.permute.xlu0 %1044
      %v1046 = vlaneseq
      %v1047 = vshrl.u32 %v1046, 7
      %v1048 = vadd.s32 %v1047, 96
      %1049 = vset.pattern.permute.xlu0 %v1048
      %1050 = vperm.xlu0 %1049, %v1021
      %v1051 = vpop.permute.xlu0 %1050
      %v1052 = vlaneseq
      %v1053 = vshrl.u32 %v1052, 7
      %v1054 = vadd.s32 %v1053, 104
      %1055 = vset.pattern.permute.xlu0 %v1054
      %1056 = vperm.xlu0 %1055, %v1021
      %v1057 = vpop.permute.xlu0 %1056
      %v1058 = vlaneseq
      %v1059 = vshrl.u32 %v1058, 7
      %v1060 = vadd.s32 %v1059, 112
      %1061 = vset.pattern.permute.xlu0 %v1060
      %1062 = vperm.xlu0 %1061, %v1021
      %v1063 = vpop.permute.xlu0 %1062
      %v1064 = vlaneseq
      %v1065 = vshrl.u32 %v1064, 7
      %v1066 = vadd.s32 %v1065, 120
      %1067 = vset.pattern.permute.xlu0 %v1066
      %1068 = vperm.xlu0 %1067, %v1021
      %v1069 = vpop.permute.xlu0 %1068
      %v1070 = vperm.slane %v970, 2
      %v1071 = vlaneseq
      %v1072 = vshrl.u32 %v1071, 7
      %v1073 = vadd.s32 %v1072, 64
      %1074 = vset.pattern.permute.xlu0 %v1073
      %1075 = vperm.xlu0 %1074, %v1070
      %v1076 = vpop.permute.xlu0 %1075
      %v1077 = vlaneseq
      %v1078 = vshrl.u32 %v1077, 7
      %v1079 = vadd.s32 %v1078, 72
      %1080 = vset.pattern.permute.xlu0 %v1079
      %1081 = vperm.xlu0 %1080, %v1070
      %v1082 = vpop.permute.xlu0 %1081
      %v1083 = vlaneseq
      %v1084 = vshrl.u32 %v1083, 7
      %v1085 = vadd.s32 %v1084, 80
      %1086 = vset.pattern.permute.xlu0 %v1085
      %1087 = vperm.xlu0 %1086, %v1070
      %v1088 = vpop.permute.xlu0 %1087
      %v1089 = vlaneseq
      %v1090 = vshrl.u32 %v1089, 7
      %v1091 = vadd.s32 %v1090, 88
      %1092 = vset.pattern.permute.xlu0 %v1091
      %1093 = vperm.xlu0 %1092, %v1070
      %v1094 = vpop.permute.xlu0 %1093
      %v1095 = vlaneseq
      %v1096 = vshrl.u32 %v1095, 7
      %v1097 = vadd.s32 %v1096, 96
      %1098 = vset.pattern.permute.xlu0 %v1097
      %1099 = vperm.xlu0 %1098, %v1070
      %v1100 = vpop.permute.xlu0 %1099
      %v1101 = vlaneseq
      %v1102 = vshrl.u32 %v1101, 7
      %v1103 = vadd.s32 %v1102, 104
      %1104 = vset.pattern.permute.xlu0 %v1103
      %1105 = vperm.xlu0 %1104, %v1070
      %v1106 = vpop.permute.xlu0 %1105
      %v1107 = vlaneseq
      %v1108 = vshrl.u32 %v1107, 7
      %v1109 = vadd.s32 %v1108, 112
      %1110 = vset.pattern.permute.xlu0 %v1109
      %1111 = vperm.xlu0 %1110, %v1070
      %v1112 = vpop.permute.xlu0 %1111
      %v1113 = vlaneseq
      %v1114 = vshrl.u32 %v1113, 7
      %v1115 = vadd.s32 %v1114, 120
      %1116 = vset.pattern.permute.xlu0 %v1115
      %1117 = vperm.xlu0 %1116, %v1070
      %v1118 = vpop.permute.xlu0 %1117
      %v1119 = vperm.slane %v970, 3
      %v1120 = vlaneseq
      %v1121 = vshrl.u32 %v1120, 7
      %v1122 = vadd.s32 %v1121, 64
      %1123 = vset.pattern.permute.xlu0 %v1122
      %1124 = vperm.xlu0 %1123, %v1119
      %v1125 = vpop.permute.xlu0 %1124
      %v1126 = vlaneseq
      %v1127 = vshrl.u32 %v1126, 7
      %v1128 = vadd.s32 %v1127, 72
      %1129 = vset.pattern.permute.xlu0 %v1128
      %1130 = vperm.xlu0 %1129, %v1119
      %v1131 = vpop.permute.xlu0 %1130
      %v1132 = vlaneseq
      %v1133 = vshrl.u32 %v1132, 7
      %v1134 = vadd.s32 %v1133, 80
      %1135 = vset.pattern.permute.xlu0 %v1134
      %1136 = vperm.xlu0 %1135, %v1119
      %v1137 = vpop.permute.xlu0 %1136
      %v1138 = vlaneseq
      %v1139 = vshrl.u32 %v1138, 7
      %v1140 = vadd.s32 %v1139, 88
      %1141 = vset.pattern.permute.xlu0 %v1140
      %1142 = vperm.xlu0 %1141, %v1119
      %v1143 = vpop.permute.xlu0 %1142
      %v1144 = vlaneseq
      %v1145 = vshrl.u32 %v1144, 7
      %v1146 = vadd.s32 %v1145, 96
      %1147 = vset.pattern.permute.xlu0 %v1146
      %1148 = vperm.xlu0 %1147, %v1119
      %v1149 = vpop.permute.xlu0 %1148
      %v1150 = vlaneseq
      %v1151 = vshrl.u32 %v1150, 7
      %v1152 = vadd.s32 %v1151, 104
      %1153 = vset.pattern.permute.xlu0 %v1152
      %1154 = vperm.xlu0 %1153, %v1119
      %v1155 = vpop.permute.xlu0 %1154
      %v1156 = vlaneseq
      %v1157 = vshrl.u32 %v1156, 7
      %v1158 = vadd.s32 %v1157, 112
      %1159 = vset.pattern.permute.xlu0 %v1158
      %1160 = vperm.xlu0 %1159, %v1119
      %v1161 = vpop.permute.xlu0 %1160
      %v1162 = vlaneseq
      %v1163 = vshrl.u32 %v1162, 7
      %v1164 = vadd.s32 %v1163, 120
      %1165 = vset.pattern.permute.xlu0 %v1164
      %1166 = vperm.xlu0 %1165, %v1119
      %v1167 = vpop.permute.xlu0 %1166
      %v1168 = vperm.slane %v971, 0
      %v1169 = vlaneseq
      %v1170 = vshrl.u32 %v1169, 7
      %v1171 = vadd.s32 %v1170, 64
      %1172 = vset.pattern.permute.xlu0 %v1171
      %1173 = vperm.xlu0 %1172, %v1168
      %v1174 = vpop.permute.xlu0 %1173
      %v1175 = vlaneseq
      %v1176 = vshrl.u32 %v1175, 7
      %v1177 = vadd.s32 %v1176, 72
      %1178 = vset.pattern.permute.xlu0 %v1177
      %1179 = vperm.xlu0 %1178, %v1168
      %v1180 = vpop.permute.xlu0 %1179
      %v1181 = vlaneseq
      %v1182 = vshrl.u32 %v1181, 7
      %v1183 = vadd.s32 %v1182, 80
      %1184 = vset.pattern.permute.xlu0 %v1183
      %1185 = vperm.xlu0 %1184, %v1168
      %v1186 = vpop.permute.xlu0 %1185
      %v1187 = vlaneseq
      %v1188 = vshrl.u32 %v1187, 7
      %v1189 = vadd.s32 %v1188, 88
      %1190 = vset.pattern.permute.xlu0 %v1189
      %1191 = vperm.xlu0 %1190, %v1168
      %v1192 = vpop.permute.xlu0 %1191
      %v1193 = vlaneseq
      %v1194 = vshrl.u32 %v1193, 7
      %v1195 = vadd.s32 %v1194, 96
      %1196 = vset.pattern.permute.xlu0 %v1195
      %1197 = vperm.xlu0 %1196, %v1168
      %v1198 = vpop.permute.xlu0 %1197
      %v1199 = vlaneseq
      %v1200 = vshrl.u32 %v1199, 7
      %v1201 = vadd.s32 %v1200, 104
      %1202 = vset.pattern.permute.xlu0 %v1201
      %1203 = vperm.xlu0 %1202, %v1168
      %v1204 = vpop.permute.xlu0 %1203
      %v1205 = vlaneseq
      %v1206 = vshrl.u32 %v1205, 7
      %v1207 = vadd.s32 %v1206, 112
      %1208 = vset.pattern.permute.xlu0 %v1207
      %1209 = vperm.xlu0 %1208, %v1168
      %v1210 = vpop.permute.xlu0 %1209
      %v1211 = vlaneseq
      %v1212 = vshrl.u32 %v1211, 7
      %v1213 = vadd.s32 %v1212, 120
      %1214 = vset.pattern.permute.xlu0 %v1213
      %1215 = vperm.xlu0 %1214, %v1168
      %v1216 = vpop.permute.xlu0 %1215
      %v1217 = vperm.slane %v971, 1
      %v1218 = vlaneseq
      %v1219 = vshrl.u32 %v1218, 7
      %v1220 = vadd.s32 %v1219, 64
      %1221 = vset.pattern.permute.xlu0 %v1220
      %1222 = vperm.xlu0 %1221, %v1217
      %v1223 = vpop.permute.xlu0 %1222
      %v1224 = vlaneseq
      %v1225 = vshrl.u32 %v1224, 7
      %v1226 = vadd.s32 %v1225, 72
      %1227 = vset.pattern.permute.xlu0 %v1226
      %1228 = vperm.xlu0 %1227, %v1217
      %v1229 = vpop.permute.xlu0 %1228
      %v1230 = vlaneseq
      %v1231 = vshrl.u32 %v1230, 7
      %v1232 = vadd.s32 %v1231, 80
      %1233 = vset.pattern.permute.xlu0 %v1232
      %1234 = vperm.xlu0 %1233, %v1217
      %v1235 = vpop.permute.xlu0 %1234
      %v1236 = vlaneseq
      %v1237 = vshrl.u32 %v1236, 7
      %v1238 = vadd.s32 %v1237, 88
      %1239 = vset.pattern.permute.xlu0 %v1238
      %1240 = vperm.xlu0 %1239, %v1217
      %v1241 = vpop.permute.xlu0 %1240
      %v1242 = vlaneseq
      %v1243 = vshrl.u32 %v1242, 7
      %v1244 = vadd.s32 %v1243, 96
      %1245 = vset.pattern.permute.xlu0 %v1244
      %1246 = vperm.xlu0 %1245, %v1217
      %v1247 = vpop.permute.xlu0 %1246
      %v1248 = vlaneseq
      %v1249 = vshrl.u32 %v1248, 7
      %v1250 = vadd.s32 %v1249, 104
      %1251 = vset.pattern.permute.xlu0 %v1250
      %1252 = vperm.xlu0 %1251, %v1217
      %v1253 = vpop.permute.xlu0 %1252
      %v1254 = vlaneseq
      %v1255 = vshrl.u32 %v1254, 7
      %v1256 = vadd.s32 %v1255, 112
      %1257 = vset.pattern.permute.xlu0 %v1256
      %1258 = vperm.xlu0 %1257, %v1217
      %v1259 = vpop.permute.xlu0 %1258
      %v1260 = vlaneseq
      %v1261 = vshrl.u32 %v1260, 7
      %v1262 = vadd.s32 %v1261, 120
      %1263 = vset.pattern.permute.xlu0 %v1262
      %1264 = vperm.xlu0 %1263, %v1217
      %v1265 = vpop.permute.xlu0 %1264
      %v1266 = vperm.slane %v971, 2
      %v1267 = vlaneseq
      %v1268 = vshrl.u32 %v1267, 7
      %v1269 = vadd.s32 %v1268, 64
      %1270 = vset.pattern.permute.xlu0 %v1269
      %1271 = vperm.xlu0 %1270, %v1266
      %v1272 = vpop.permute.xlu0 %1271
      %v1273 = vlaneseq
      %v1274 = vshrl.u32 %v1273, 7
      %v1275 = vadd.s32 %v1274, 72
      %1276 = vset.pattern.permute.xlu0 %v1275
      %1277 = vperm.xlu0 %1276, %v1266
      %v1278 = vpop.permute.xlu0 %1277
      %v1279 = vlaneseq
      %v1280 = vshrl.u32 %v1279, 7
      %v1281 = vadd.s32 %v1280, 80
      %1282 = vset.pattern.permute.xlu0 %v1281
      %1283 = vperm.xlu0 %1282, %v1266
      %v1284 = vpop.permute.xlu0 %1283
      %v1285 = vlaneseq
      %v1286 = vshrl.u32 %v1285, 7
      %v1287 = vadd.s32 %v1286, 88
      %1288 = vset.pattern.permute.xlu0 %v1287
      %1289 = vperm.xlu0 %1288, %v1266
      %v1290 = vpop.permute.xlu0 %1289
      %v1291 = vlaneseq
      %v1292 = vshrl.u32 %v1291, 7
      %v1293 = vadd.s32 %v1292, 96
      %1294 = vset.pattern.permute.xlu0 %v1293
      %1295 = vperm.xlu0 %1294, %v1266
      %v1296 = vpop.permute.xlu0 %1295
      %v1297 = vlaneseq
      %v1298 = vshrl.u32 %v1297, 7
      %v1299 = vadd.s32 %v1298, 104
      %1300 = vset.pattern.permute.xlu0 %v1299
      %1301 = vperm.xlu0 %1300, %v1266
      %v1302 = vpop.permute.xlu0 %1301
      %v1303 = vlaneseq
      %v1304 = vshrl.u32 %v1303, 7
      %v1305 = vadd.s32 %v1304, 112
      %1306 = vset.pattern.permute.xlu0 %v1305
      %1307 = vperm.xlu0 %1306, %v1266
      %v1308 = vpop.permute.xlu0 %1307
      %v1309 = vlaneseq
      %v1310 = vshrl.u32 %v1309, 7
      %v1311 = vadd.s32 %v1310, 120
      %1312 = vset.pattern.permute.xlu0 %v1311
      %1313 = vperm.xlu0 %1312, %v1266
      %v1314 = vpop.permute.xlu0 %1313
      %v1315 = vperm.slane %v971, 3
      %v1316 = vlaneseq
      %v1317 = vshrl.u32 %v1316, 7
      %v1318 = vadd.s32 %v1317, 64
      %1319 = vset.pattern.permute.xlu0 %v1318
      %1320 = vperm.xlu0 %1319, %v1315
      %v1321 = vpop.permute.xlu0 %1320
      %v1322 = vlaneseq
      %v1323 = vshrl.u32 %v1322, 7
      %v1324 = vadd.s32 %v1323, 72
      %1325 = vset.pattern.permute.xlu0 %v1324
      %1326 = vperm.xlu0 %1325, %v1315
      %v1327 = vpop.permute.xlu0 %1326
      %v1328 = vlaneseq
      %v1329 = vshrl.u32 %v1328, 7
      %v1330 = vadd.s32 %v1329, 80
      %1331 = vset.pattern.permute.xlu0 %v1330
      %1332 = vperm.xlu0 %1331, %v1315
      %v1333 = vpop.permute.xlu0 %1332
      %v1334 = vlaneseq
      %v1335 = vshrl.u32 %v1334, 7
      %v1336 = vadd.s32 %v1335, 88
      %1337 = vset.pattern.permute.xlu0 %v1336
      %1338 = vperm.xlu0 %1337, %v1315
      %v1339 = vpop.permute.xlu0 %1338
      %v1340 = vlaneseq
      %v1341 = vshrl.u32 %v1340, 7
      %v1342 = vadd.s32 %v1341, 96
      %1343 = vset.pattern.permute.xlu0 %v1342
      %1344 = vperm.xlu0 %1343, %v1315
      %v1345 = vpop.permute.xlu0 %1344
      %v1346 = vlaneseq
      %v1347 = vshrl.u32 %v1346, 7
      %v1348 = vadd.s32 %v1347, 104
      %1349 = vset.pattern.permute.xlu0 %v1348
      %1350 = vperm.xlu0 %1349, %v1315
      %v1351 = vpop.permute.xlu0 %1350
      %v1352 = vlaneseq
      %v1353 = vshrl.u32 %v1352, 7
      %v1354 = vadd.s32 %v1353, 112
      %1355 = vset.pattern.permute.xlu0 %v1354
      %1356 = vperm.xlu0 %1355, %v1315
      %v1357 = vpop.permute.xlu0 %1356
      %v1358 = vlaneseq
      %v1359 = vshrl.u32 %v1358, 7
      %v1360 = vadd.s32 %v1359, 120
      %1361 = vset.pattern.permute.xlu0 %v1360
      %1362 = vperm.xlu0 %1361, %v1315
      %v1363 = vpop.permute.xlu0 %1362
      %v1364 = vmul.f32 %v274, %v978
      %v1365 = vmul.f32 %v275, %v978
      %v1366 = vmul.f32 %v276, %v984
      %v1367 = vmul.f32 %v277, %v984
      %v1368 = vmul.f32 %v278, %v990
      %v1369 = vmul.f32 %v279, %v990
      %v1370 = vmul.f32 %v280, %v996
      %v1371 = vmul.f32 %v281, %v996
      %v1372 = vmul.f32 %v282, %v1002
      %v1373 = vmul.f32 %v283, %v1002
      %v1374 = vmul.f32 %v284, %v1008
      %v1375 = vmul.f32 %v285, %v1008
      %v1376 = vmul.f32 %v286, %v1014
      %v1377 = vmul.f32 %v287, %v1014
      %v1378 = vmul.f32 %v288, %v1020
      %v1379 = vmul.f32 %v289, %v1020
      %v1380 = vmul.f32 %v290, %v1027
      %v1381 = vmul.f32 %v291, %v1027
      %v1382 = vmul.f32 %v292, %v1033
      %v1383 = vmul.f32 %v293, %v1033
      %v1384 = vmul.f32 %v294, %v1039
      %v1385 = vmul.f32 %v295, %v1039
      %v1386 = vmul.f32 %v296, %v1045
      %v1387 = vmul.f32 %v297, %v1045
      %v1388 = vmul.f32 %v298, %v1051
      %v1389 = vmul.f32 %v299, %v1051
      %v1390 = vmul.f32 %v300, %v1057
      %v1391 = vmul.f32 %v301, %v1057
      %v1392 = vmul.f32 %v302, %v1063
      %v1393 = vmul.f32 %v303, %v1063
      %v1394 = vmul.f32 %v304, %v1069
      %v1395 = vmul.f32 %v305, %v1069
      %v1396 = vmul.f32 %v306, %v1076
      %v1397 = vmul.f32 %v307, %v1076
      %v1398 = vmul.f32 %v308, %v1082
      %v1399 = vmul.f32 %v309, %v1082
      %v1400 = vmul.f32 %v310, %v1088
      %v1401 = vmul.f32 %v311, %v1088
      %v1402 = vmul.f32 %v312, %v1094
      %v1403 = vmul.f32 %v313, %v1094
      %v1404 = vmul.f32 %v314, %v1100
      %v1405 = vmul.f32 %v315, %v1100
      %v1406 = vmul.f32 %v316, %v1106
      %v1407 = vmul.f32 %v317, %v1106
      %v1408 = vmul.f32 %v318, %v1112
      %v1409 = vmul.f32 %v319, %v1112
      %v1410 = vmul.f32 %v320, %v1118
      %v1411 = vmul.f32 %v321, %v1118
      %v1412 = vmul.f32 %v322, %v1125
      %v1413 = vmul.f32 %v323, %v1125
      %v1414 = vmul.f32 %v324, %v1131
      %v1415 = vmul.f32 %v325, %v1131
      %v1416 = vmul.f32 %v326, %v1137
      %v1417 = vmul.f32 %v327, %v1137
      %v1418 = vmul.f32 %v328, %v1143
      %v1419 = vmul.f32 %v329, %v1143
      %v1420 = vmul.f32 %v330, %v1149
      %v1421 = vmul.f32 %v331, %v1149
      %v1422 = vmul.f32 %v332, %v1155
      %v1423 = vmul.f32 %v333, %v1155
      %v1424 = vmul.f32 %v334, %v1161
      %v1425 = vmul.f32 %v335, %v1161
      %v1426 = vmul.f32 %v336, %v1167
      %v1427 = vmul.f32 %v337, %v1167
      %1428 = vst [vmem:[%s265] sm:$0xff] %v1364
      %1429 = vst [vmem:[%s265 + $0x8] sm:$0xff] %v1365
      %1430 = vst [vmem:[%s265 + $0x10] sm:$0xff] %v1366
      %1431 = vst [vmem:[%s265 + $0x18] sm:$0xff] %v1367
      %1432 = vst [vmem:[%s265 + $0x20] sm:$0xff] %v1368
      %1433 = vst [vmem:[%s265 + $0x28] sm:$0xff] %v1369
      %1434 = vst [vmem:[%s265 + $0x30] sm:$0xff] %v1370
      %1435 = vst [vmem:[%s265 + $0x38] sm:$0xff] %v1371
      %1436 = vst [vmem:[%s265 + $0x40] sm:$0xff] %v1372
      %1437 = vst [vmem:[%s265 + $0x48] sm:$0xff] %v1373
      %1438 = vst [vmem:[%s265 + $0x50] sm:$0xff] %v1374
      %1439 = vst [vmem:[%s265 + $0x58] sm:$0xff] %v1375
      %1440 = vst [vmem:[%s265 + $0x60] sm:$0xff] %v1376
      %1441 = vst [vmem:[%s265 + $0x68] sm:$0xff] %v1377
      %1442 = vst [vmem:[%s265 + $0x70] sm:$0xff] %v1378
      %1443 = vst [vmem:[%s265 + $0x78] sm:$0xff] %v1379
      %1444 = vst [vmem:[%s265 + $0x80] sm:$0xff] %v1380
      %1445 = vst [vmem:[%s265 + $0x88] sm:$0xff] %v1381
      %1446 = vst [vmem:[%s265 + $0x90] sm:$0xff] %v1382
      %1447 = vst [vmem:[%s265 + $0x98] sm:$0xff] %v1383
      %1448 = vst [vmem:[%s265 + $0xa0] sm:$0xff] %v1384
      %1449 = vst [vmem:[%s265 + $0xa8] sm:$0xff] %v1385
      %1450 = vst [vmem:[%s265 + $0xb0] sm:$0xff] %v1386
      %1451 = vst [vmem:[%s265 + $0xb8] sm:$0xff] %v1387
      %1452 = vst [vmem:[%s265 + $0xc0] sm:$0xff] %v1388
      %1453 = vst [vmem:[%s265 + $0xc8] sm:$0xff] %v1389
      %1454 = vst [vmem:[%s265 + $0xd0] sm:$0xff] %v1390
      %1455 = vst [vmem:[%s265 + $0xd8] sm:$0xff] %v1391
      %1456 = vst [vmem:[%s265 + $0xe0] sm:$0xff] %v1392
      %1457 = vst [vmem:[%s265 + $0xe8] sm:$0xff] %v1393
      %1458 = vst [vmem:[%s265 + $0xf0] sm:$0xff] %v1394
      %1459 = vst [vmem:[%s265 + $0xf8] sm:$0xff] %v1395
      %1460 = vst [vmem:[%s265 + $0x100] sm:$0xff] %v1396
      %1461 = vst [vmem:[%s265 + $0x108] sm:$0xff] %v1397
      %1462 = vst [vmem:[%s265 + $0x110] sm:$0xff] %v1398
      %1463 = vst [vmem:[%s265 + $0x118] sm:$0xff] %v1399
      %1464 = vst [vmem:[%s265 + $0x120] sm:$0xff] %v1400
      %1465 = vst [vmem:[%s265 + $0x128] sm:$0xff] %v1401
      %1466 = vst [vmem:[%s265 + $0x130] sm:$0xff] %v1402
      %1467 = vst [vmem:[%s265 + $0x138] sm:$0xff] %v1403
      %1468 = vst [vmem:[%s265 + $0x140] sm:$0xff] %v1404
      %1469 = vst [vmem:[%s265 + $0x148] sm:$0xff] %v1405
      %1470 = vst [vmem:[%s265 + $0x150] sm:$0xff] %v1406
      %1471 = vst [vmem:[%s265 + $0x158] sm:$0xff] %v1407
      %1472 = vst [vmem:[%s265 + $0x160] sm:$0xff] %v1408
      %1473 = vst [vmem:[%s265 + $0x168] sm:$0xff] %v1409
      %1474 = vst [vmem:[%s265 + $0x170] sm:$0xff] %v1410
      %1475 = vst [vmem:[%s265 + $0x178] sm:$0xff] %v1411
      %1476 = vst [vmem:[%s265 + $0x180] sm:$0xff] %v1412
      %1477 = vst [vmem:[%s265 + $0x188] sm:$0xff] %v1413
      %1478 = vst [vmem:[%s265 + $0x190] sm:$0xff] %v1414
      %1479 = vst [vmem:[%s265 + $0x198] sm:$0xff] %v1415
      %1480 = vst [vmem:[%s265 + $0x1a0] sm:$0xff] %v1416
      %1481 = vst [vmem:[%s265 + $0x1a8] sm:$0xff] %v1417
      %1482 = vst [vmem:[%s265 + $0x1b0] sm:$0xff] %v1418
      %1483 = vst [vmem:[%s265 + $0x1b8] sm:$0xff] %v1419
      %1484 = vst [vmem:[%s265 + $0x1c0] sm:$0xff] %v1420
      %1485 = vst [vmem:[%s265 + $0x1c8] sm:$0xff] %v1421
      %1486 = vst [vmem:[%s265 + $0x1d0] sm:$0xff] %v1422
      %1487 = vst [vmem:[%s265 + $0x1d8] sm:$0xff] %v1423
      %1488 = vst [vmem:[%s265 + $0x1e0] sm:$0xff] %v1424
      %1489 = vst [vmem:[%s265 + $0x1e8] sm:$0xff] %v1425
      %1490 = vst [vmem:[%s265 + $0x1f0] sm:$0xff] %v1426
      %1491 = vst [vmem:[%s265 + $0x1f8] sm:$0xff] %v1427
      %v1492 = vld [vmem:[%s258] sm:$0xff]
      %v1493 = vld [vmem:[%s258 + $0x8] sm:$0xff]
      %v1494 = vld [vmem:[%s258 + $0x10] sm:$0xff]
      %v1495 = vld [vmem:[%s258 + $0x18] sm:$0xff]
      %v1496 = vld [vmem:[%s258 + $0x20] sm:$0xff]
      %v1497 = vld [vmem:[%s258 + $0x28] sm:$0xff]
      %v1498 = vld [vmem:[%s258 + $0x30] sm:$0xff]
      %v1499 = vld [vmem:[%s258 + $0x38] sm:$0xff]
      %v1500 = vld [vmem:[%s258 + $0x40] sm:$0xff]
      %v1501 = vld [vmem:[%s258 + $0x48] sm:$0xff]
      %v1502 = vld [vmem:[%s258 + $0x50] sm:$0xff]
      %v1503 = vld [vmem:[%s258 + $0x58] sm:$0xff]
      %v1504 = vld [vmem:[%s258 + $0x60] sm:$0xff]
      %v1505 = vld [vmem:[%s258 + $0x68] sm:$0xff]
      %v1506 = vld [vmem:[%s258 + $0x70] sm:$0xff]
      %v1507 = vld [vmem:[%s258 + $0x78] sm:$0xff]
      %v1508 = vld [vmem:[%s258 + $0x80] sm:$0xff]
      %v1509 = vld [vmem:[%s258 + $0x88] sm:$0xff]
      %v1510 = vld [vmem:[%s258 + $0x90] sm:$0xff]
      %v1511 = vld [vmem:[%s258 + $0x98] sm:$0xff]
      %v1512 = vld [vmem:[%s258 + $0xa0] sm:$0xff]
      %v1513 = vld [vmem:[%s258 + $0xa8] sm:$0xff]
      %v1514 = vld [vmem:[%s258 + $0xb0] sm:$0xff]
      %v1515 = vld [vmem:[%s258 + $0xb8] sm:$0xff]
      %v1516 = vld [vmem:[%s258 + $0xc0] sm:$0xff]
      %v1517 = vld [vmem:[%s258 + $0xc8] sm:$0xff]
      %v1518 = vld [vmem:[%s258 + $0xd0] sm:$0xff]
      %v1519 = vld [vmem:[%s258 + $0xd8] sm:$0xff]
      %v1520 = vld [vmem:[%s258 + $0xe0] sm:$0xff]
      %v1521 = vld [vmem:[%s258 + $0xe8] sm:$0xff]
      %v1522 = vld [vmem:[%s258 + $0xf0] sm:$0xff]
      %v1523 = vld [vmem:[%s258 + $0xf8] sm:$0xff]
      %v1524 = vld [vmem:[%s258 + $0x100] sm:$0xff]
      %v1525 = vld [vmem:[%s258 + $0x108] sm:$0xff]
      %v1526 = vld [vmem:[%s258 + $0x110] sm:$0xff]
      %v1527 = vld [vmem:[%s258 + $0x118] sm:$0xff]
      %v1528 = vld [vmem:[%s258 + $0x120] sm:$0xff]
      %v1529 = vld [vmem:[%s258 + $0x128] sm:$0xff]
      %v1530 = vld [vmem:[%s258 + $0x130] sm:$0xff]
      %v1531 = vld [vmem:[%s258 + $0x138] sm:$0xff]
      %v1532 = vld [vmem:[%s258 + $0x140] sm:$0xff]
      %v1533 = vld [vmem:[%s258 + $0x148] sm:$0xff]
      %v1534 = vld [vmem:[%s258 + $0x150] sm:$0xff]
      %v1535 = vld [vmem:[%s258 + $0x158] sm:$0xff]
      %v1536 = vld [vmem:[%s258 + $0x160] sm:$0xff]
      %v1537 = vld [vmem:[%s258 + $0x168] sm:$0xff]
      %v1538 = vld [vmem:[%s258 + $0x170] sm:$0xff]
      %v1539 = vld [vmem:[%s258 + $0x178] sm:$0xff]
      %v1540 = vld [vmem:[%s258 + $0x180] sm:$0xff]
      %v1541 = vld [vmem:[%s258 + $0x188] sm:$0xff]
      %v1542 = vld [vmem:[%s258 + $0x190] sm:$0xff]
      %v1543 = vld [vmem:[%s258 + $0x198] sm:$0xff]
      %v1544 = vld [vmem:[%s258 + $0x1a0] sm:$0xff]
      %v1545 = vld [vmem:[%s258 + $0x1a8] sm:$0xff]
      %v1546 = vld [vmem:[%s258 + $0x1b0] sm:$0xff]
      %v1547 = vld [vmem:[%s258 + $0x1b8] sm:$0xff]
      %v1548 = vld [vmem:[%s258 + $0x1c0] sm:$0xff]
      %v1549 = vld [vmem:[%s258 + $0x1c8] sm:$0xff]
      %v1550 = vld [vmem:[%s258 + $0x1d0] sm:$0xff]
      %v1551 = vld [vmem:[%s258 + $0x1d8] sm:$0xff]
      %v1552 = vld [vmem:[%s258 + $0x1e0] sm:$0xff]
      %v1553 = vld [vmem:[%s258 + $0x1e8] sm:$0xff]
      %v1554 = vld [vmem:[%s258 + $0x1f0] sm:$0xff]
      %v1555 = vld [vmem:[%s258 + $0x1f8] sm:$0xff]
      %v1556 = vmul.f32 %v1492, %v1174
      %v1557 = vmul.f32 %v1493, %v1174
      %v1558 = vmul.f32 %v1494, %v1180
      %v1559 = vmul.f32 %v1495, %v1180
      %v1560 = vmul.f32 %v1496, %v1186
      %v1561 = vmul.f32 %v1497, %v1186
      %v1562 = vmul.f32 %v1498, %v1192
      %v1563 = vmul.f32 %v1499, %v1192
      %v1564 = vmul.f32 %v1500, %v1198
      %v1565 = vmul.f32 %v1501, %v1198
      %v1566 = vmul.f32 %v1502, %v1204
      %v1567 = vmul.f32 %v1503, %v1204
      %v1568 = vmul.f32 %v1504, %v1210
      %v1569 = vmul.f32 %v1505, %v1210
      %v1570 = vmul.f32 %v1506, %v1216
      %v1571 = vmul.f32 %v1507, %v1216
      %v1572 = vmul.f32 %v1508, %v1223
      %v1573 = vmul.f32 %v1509, %v1223
      %v1574 = vmul.f32 %v1510, %v1229
      %v1575 = vmul.f32 %v1511, %v1229
      %v1576 = vmul.f32 %v1512, %v1235
      %v1577 = vmul.f32 %v1513, %v1235
      %v1578 = vmul.f32 %v1514, %v1241
      %v1579 = vmul.f32 %v1515, %v1241
      %v1580 = vmul.f32 %v1516, %v1247
      %v1581 = vmul.f32 %v1517, %v1247
      %v1582 = vmul.f32 %v1518, %v1253
      %v1583 = vmul.f32 %v1519, %v1253
      %v1584 = vmul.f32 %v1520, %v1259
      %v1585 = vmul.f32 %v1521, %v1259
      %v1586 = vmul.f32 %v1522, %v1265
      %v1587 = vmul.f32 %v1523, %v1265
      %v1588 = vmul.f32 %v1524, %v1272
      %v1589 = vmul.f32 %v1525, %v1272
      %v1590 = vmul.f32 %v1526, %v1278
      %v1591 = vmul.f32 %v1527, %v1278
      %v1592 = vmul.f32 %v1528, %v1284
      %v1593 = vmul.f32 %v1529, %v1284
      %v1594 = vmul.f32 %v1530, %v1290
      %v1595 = vmul.f32 %v1531, %v1290
      %v1596 = vmul.f32 %v1532, %v1296
      %v1597 = vmul.f32 %v1533, %v1296
      %v1598 = vmul.f32 %v1534, %v1302
      %v1599 = vmul.f32 %v1535, %v1302
      %v1600 = vmul.f32 %v1536, %v1308
      %v1601 = vmul.f32 %v1537, %v1308
      %v1602 = vmul.f32 %v1538, %v1314
      %v1603 = vmul.f32 %v1539, %v1314
      %v1604 = vmul.f32 %v1540, %v1321
      %v1605 = vmul.f32 %v1541, %v1321
      %v1606 = vmul.f32 %v1542, %v1327
      %v1607 = vmul.f32 %v1543, %v1327
      %v1608 = vmul.f32 %v1544, %v1333
      %v1609 = vmul.f32 %v1545, %v1333
      %v1610 = vmul.f32 %v1546, %v1339
      %v1611 = vmul.f32 %v1547, %v1339
      %v1612 = vmul.f32 %v1548, %v1345
      %v1613 = vmul.f32 %v1549, %v1345
      %v1614 = vmul.f32 %v1550, %v1351
      %v1615 = vmul.f32 %v1551, %v1351
      %v1616 = vmul.f32 %v1552, %v1357
      %v1617 = vmul.f32 %v1553, %v1357
      %v1618 = vmul.f32 %v1554, %v1363
      %v1619 = vmul.f32 %v1555, %v1363
      %1620 = vst [vmem:[%s272] sm:$0xff] %v1556
      %1621 = vst [vmem:[%s272 + $0x8] sm:$0xff] %v1557
      %1622 = vst [vmem:[%s272 + $0x10] sm:$0xff] %v1558
      %1623 = vst [vmem:[%s272 + $0x18] sm:$0xff] %v1559
      %1624 = vst [vmem:[%s272 + $0x20] sm:$0xff] %v1560
      %1625 = vst [vmem:[%s272 + $0x28] sm:$0xff] %v1561
      %1626 = vst [vmem:[%s272 + $0x30] sm:$0xff] %v1562
      %1627 = vst [vmem:[%s272 + $0x38] sm:$0xff] %v1563
      %1628 = vst [vmem:[%s272 + $0x40] sm:$0xff] %v1564
      %1629 = vst [vmem:[%s272 + $0x48] sm:$0xff] %v1565
      %1630 = vst [vmem:[%s272 + $0x50] sm:$0xff] %v1566
      %1631 = vst [vmem:[%s272 + $0x58] sm:$0xff] %v1567
      %1632 = vst [vmem:[%s272 + $0x60] sm:$0xff] %v1568
      %1633 = vst [vmem:[%s272 + $0x68] sm:$0xff] %v1569
      %1634 = vst [vmem:[%s272 + $0x70] sm:$0xff] %v1570
      %1635 = vst [vmem:[%s272 + $0x78] sm:$0xff] %v1571
      %1636 = vst [vmem:[%s272 + $0x80] sm:$0xff] %v1572
      %1637 = vst [vmem:[%s272 + $0x88] sm:$0xff] %v1573
      %1638 = vst [vmem:[%s272 + $0x90] sm:$0xff] %v1574
      %1639 = vst [vmem:[%s272 + $0x98] sm:$0xff] %v1575
      %1640 = vst [vmem:[%s272 + $0xa0] sm:$0xff] %v1576
      %1641 = vst [vmem:[%s272 + $0xa8] sm:$0xff] %v1577
      %1642 = vst [vmem:[%s272 + $0xb0] sm:$0xff] %v1578
      %1643 = vst [vmem:[%s272 + $0xb8] sm:$0xff] %v1579
      %1644 = vst [vmem:[%s272 + $0xc0] sm:$0xff] %v1580
      %1645 = vst [vmem:[%s272 + $0xc8] sm:$0xff] %v1581
      %1646 = vst [vmem:[%s272 + $0xd0] sm:$0xff] %v1582
      %1647 = vst [vmem:[%s272 + $0xd8] sm:$0xff] %v1583
      %1648 = vst [vmem:[%s272 + $0xe0] sm:$0xff] %v1584
      %1649 = vst [vmem:[%s272 + $0xe8] sm:$0xff] %v1585
      %1650 = vst [vmem:[%s272 + $0xf0] sm:$0xff] %v1586
      %1651 = vst [vmem:[%s272 + $0xf8] sm:$0xff] %v1587
      %1652 = vst [vmem:[%s272 + $0x100] sm:$0xff] %v1588
      %1653 = vst [vmem:[%s272 + $0x108] sm:$0xff] %v1589
      %1654 = vst [vmem:[%s272 + $0x110] sm:$0xff] %v1590
      %1655 = vst [vmem:[%s272 + $0x118] sm:$0xff] %v1591
      %1656 = vst [vmem:[%s272 + $0x120] sm:$0xff] %v1592
      %1657 = vst [vmem:[%s272 + $0x128] sm:$0xff] %v1593
      %1658 = vst [vmem:[%s272 + $0x130] sm:$0xff] %v1594
      %1659 = vst [vmem:[%s272 + $0x138] sm:$0xff] %v1595
      %1660 = vst [vmem:[%s272 + $0x140] sm:$0xff] %v1596
      %1661 = vst [vmem:[%s272 + $0x148] sm:$0xff] %v1597
      %1662 = vst [vmem:[%s272 + $0x150] sm:$0xff] %v1598
      %1663 = vst [vmem:[%s272 + $0x158] sm:$0xff] %v1599
      %1664 = vst [vmem:[%s272 + $0x160] sm:$0xff] %v1600
      %1665 = vst [vmem:[%s272 + $0x168] sm:$0xff] %v1601
      %1666 = vst [vmem:[%s272 + $0x170] sm:$0xff] %v1602
      %1667 = vst [vmem:[%s272 + $0x178] sm:$0xff] %v1603
      %1668 = vst [vmem:[%s272 + $0x180] sm:$0xff] %v1604
      %1669 = vst [vmem:[%s272 + $0x188] sm:$0xff] %v1605
      %1670 = vst [vmem:[%s272 + $0x190] sm:$0xff] %v1606
      %1671 = vst [vmem:[%s272 + $0x198] sm:$0xff] %v1607
      %1672 = vst [vmem:[%s272 + $0x1a0] sm:$0xff] %v1608
      %1673 = vst [vmem:[%s272 + $0x1a8] sm:$0xff] %v1609
      %1674 = vst [vmem:[%s272 + $0x1b0] sm:$0xff] %v1610
      %1675 = vst [vmem:[%s272 + $0x1b8] sm:$0xff] %v1611
      %1676 = vst [vmem:[%s272 + $0x1c0] sm:$0xff] %v1612
      %1677 = vst [vmem:[%s272 + $0x1c8] sm:$0xff] %v1613
      %1678 = vst [vmem:[%s272 + $0x1d0] sm:$0xff] %v1614
      %1679 = vst [vmem:[%s272 + $0x1d8] sm:$0xff] %v1615
      %1680 = vst [vmem:[%s272 + $0x1e0] sm:$0xff] %v1616
      %1681 = vst [vmem:[%s272 + $0x1e8] sm:$0xff] %v1617
      %1682 = vst [vmem:[%s272 + $0x1f0] sm:$0xff] %v1618
      %1683 = vst [vmem:[%s272 + $0x1f8] sm:$0xff] %v1619
      %s1684 = smul.u32 4, %s17
      %p1685 = scmp.lt.s32.totalorder %s1684, 7
      %s1686 = scalar_select %p1685, %s1684, 7
      %s1687 = smul.addr %s1686, 16
      %s1688 = smul.addr %s1687, 8
      %s1689 = scalar_lea.vmem %s4, %s1688
      %s1690 = smul.u32 4, %s17
      %p1691 = scmp.lt.s32.totalorder %s1690, 7
      %s1692 = scalar_select %p1691, %s1690, 7
      %s1693 = smul.addr %s1692, 16
      %s1694 = smul.addr %s1693, 8
      %s1695 = scalar_lea.vmem %s5, %s1694
      // Predicated region
      $region37: #{channel_softmax.1} parent=35 // pred_check
        %p1696 = pneg %p129
      $region38: #{channel_softmax.1} parent=35 // pred_check_branch
        %1698 = sbr.rel (%p1696) target = $region40
      $region39: #{channel_softmax.1} parent=35 // pred_region
        %s1699 = smul.u32 4, %s17
      $region40: #{channel_softmax.1} parent=35 // pred_fallthru
        _
      // Predicated region
      $region41: #{channel_softmax.1} parent=35 // pred_check
        %p1700 = pneg %p155
      $region42: #{channel_softmax.1} parent=35 // pred_check_branch
        %1702 = sbr.rel (%p1700) target = $region44
      $region43: #{channel_softmax.1} parent=35 // pred_region
        %s1703 = smul.u32 4, %s17
      $region44: #{channel_softmax.1} parent=35 // pred_fallthru
        _
    $region36: #{channel_softmax.1} parent=5 // pred_fallthru
      _
    %p1704 = scmp.le.s32.totalorder 2, %s12
    // Predicated region
    $region45: #{channel_softmax.1} parent=5 // pred_check
      %p1705 = pneg %p1704
    $region46: #{channel_softmax.1} parent=5 // pred_check_branch
      %1707 = sbr.rel (%p1705) target = $region48
    $region47: #{channel_softmax.1} parent=5 // pred_region
      %s1708 = ssub.s32 %s12, 2
      // Predicated region
      $region49: #{channel_softmax.1} parent=47 // pred_check
        %p1709 = pneg %p135
      $region50: #{channel_softmax.1} parent=47 // pred_check_branch
        %1711 = sbr.rel (%p1709) target = $region52
      $region51: #{channel_softmax.1} parent=47 // pred_region
        %s1712 = smul.u32 4, %s18
        %p1713 = scmp.lt.s32.totalorder %s1712, 7
        %s1714 = scalar_select %p1713, %s1712, 7
        %s1715 = smul.addr %s1714, 16
        %s1716 = smul.addr %s1715, 8
        %s1717 = scalar_lea.vmem %s4, %s1716
      $region52: #{channel_softmax.1} parent=47 // pred_fallthru
        _
      // Predicated region
      $region53: #{channel_softmax.1} parent=47 // pred_check
        %p1718 = pneg %p161
      $region54: #{channel_softmax.1} parent=47 // pred_check_branch
        %1720 = sbr.rel (%p1718) target = $region56
      $region55: #{channel_softmax.1} parent=47 // pred_region
        %s1721 = smul.u32 4, %s18
        %p1722 = scmp.lt.s32.totalorder %s1721, 7
        %s1723 = scalar_select %p1722, %s1721, 7
        %s1724 = smul.addr %s1723, 16
        %s1725 = smul.addr %s1724, 8
        %s1726 = scalar_lea.vmem %s5, %s1725
      $region56: #{channel_softmax.1} parent=47 // pred_fallthru
        _
    $region48: #{channel_softmax.1} parent=5 // pred_fallthru
      _
  $region6: #{channel_softmax.1} parent=0 // loop_footer
    %s16 = sadd.s32 1, %s12
  $region7: #{channel_softmax.1} parent=0 // loop_footer_branch
    %11 = sbr.rel target = $region3
  $region8: #{channel_softmax.1} parent=0 // loop_exit
    _

</llo_original>
